<compile_context>
chip_gen: v7x
topology: tpu7x:2x2x1
jax: 0.10.0
libtpu: 0.0.40
codegen_flags: <defaults>
</compile_context>

<pallas_src>
import functools

import numpy as np

import jax
import jax.numpy as jnp
from jax import lax
from jax.experimental import pallas as pl
from jax.experimental.pallas import tpu as pltpu

_BATCH_BLOCK = 8            # rows per grid step == sublane count of one vreg
_DEAD_INT = -(2 ** 31)      # sentinel key for suppressed / below-threshold / padded boxes


def _round_up(x, m):
    return ((x + m - 1) // m) * m


def _is_v7x():
    try:
        return "v7" in jax.devices()[0].device_kind.lower()
    except Exception:
        return False


def _nms_kernel(scores_ref, boxes_ref, out_ref, *,
                iou_threshold, score_threshold, max_detections):
    """Greedy NMS (`max_detections` rounds) for a block of batch rows.

    scores_ref : (BB, N)      f32
    boxes_ref  : (4, BB, N)   f32   coordinate-major (x1, y1, x2, y2 planes)
    out_ref    : (BB, W)      int32 lane-dense slab: idx in lanes [0, M),
                                     valid count in lane M, zeros elsewhere.
    """
    BB, N = scores_ref.shape
    W = out_ref.shape[1]
    M = max_detections
    idx_bits = max(1, (N - 1).bit_length())     # low key bits carry the index
    idx_mask = (1 << idx_bits) - 1
    dead = jnp.int32(_DEAD_INT)

    scores = scores_ref[...]                          # (BB, N) f32
    # NOTE: for N >~ 1024 the live (8,N) working set (x1..y2, area, work)
    # approaches the vreg file; re-slice planes from boxes_ref inside the loop
    # (or tile the lane axis) in that regime.
    x1 = boxes_ref[0]                                 # (BB, N) dense planes
    y1 = boxes_ref[1]
    x2 = boxes_ref[2]
    y2 = boxes_ref[3]
    area = (x2 - x1) * (y2 - y1)                      # (BB, N)

    lane_iota = lax.broadcasted_iota(jnp.int32, (BB, N), 1)
    out_iota = lax.broadcasted_iota(jnp.int32, (BB, W), 1)

    # ---- fused max/argmax keys -------------------------------------------
    # Order-preserving f32 -> int32 map (valid for negative scores as well).
    bits = pltpu.bitcast(scores, jnp.int32)
    key = jnp.where(bits < 0, bits ^ jnp.int32(0x7FFFFFFF), bits)
    # Drop the low `idx_bits` bits of the key and embed (N-1-lane): one per-row
    # max then yields both the best score and its index, ties -> lowest index.
    # (For very large N this truncation makes near-equal scores tie; fine for
    # typical N, see correctness notes.)
    rev_idx = jnp.int32(N - 1) - lane_iota
    packed = ((key >> idx_bits) << idx_bits) | rev_idx
    alive = scores > score_threshold
    work0 = jnp.where(alive, packed, dead)

    def body(i, carry):
        work, idx_acc, count = carry

        # ---- fused max + argmax: ONE cross-lane reduction per row ----
        m_key = jnp.max(work, axis=-1, keepdims=True)                # (BB, 1)
        valid = m_key > dead                                         # (BB, 1)
        sel_idx = jnp.int32(N - 1) - (m_key & jnp.int32(idx_mask))   # (BB, 1)
        onehot = lane_iota == sel_idx                                # (BB, N)

        # ---- gather the winner's box coords (4 more reductions) ----
        def gather(v):
            return jnp.sum(jnp.where(onehot, v, 0.0), axis=-1, keepdims=True)

        sx1, sy1 = gather(x1), gather(y1)                            # (BB, 1)
        sx2, sy2 = gather(x2), gather(y2)
        sel_area = (sx2 - sx1) * (sy2 - sy1)

        # ---- divide-free IoU suppression ----
        iw = jnp.maximum(jnp.minimum(x2, sx2) - jnp.maximum(x1, sx1), 0.0)
        ih = jnp.maximum(jnp.minimum(y2, sy2) - jnp.maximum(y1, sy1), 0.0)
        inter = iw * ih
        union = area + sel_area - inter
        suppress = jnp.logical_or(inter > iou_threshold * union, onehot)
        work = jnp.where(suppress, dead, work)

        # ---- record detection i (per row, only if something was left) ----
        slot = jnp.logical_and(out_iota == i, valid)                 # (BB, W)
        idx_acc = jnp.where(slot, sel_idx, idx_acc)
        count = count + valid.astype(jnp.int32)
        return work, idx_acc, count

    idx0 = jnp.where(out_iota < M, jnp.int32(-1), jnp.int32(0))      # (BB, W)
    cnt0 = jnp.zeros((BB, 1), jnp.int32)
    _, idx_acc, count = lax.fori_loop(0, M, body, (work0, idx0, cnt0),
                                      unroll=True)

    # Single lane-dense unmasked store: idx in lanes [0,M), count in lane M.
    out_ref[...] = jnp.where(out_iota == M, count, idx_acc)


def nms(scores, boxes, classes=None, *,
        iou_threshold=0.5, score_threshold=0.05, nms_max_detections=16):
    """Pallas equivalent of Nms.forward (the IPU custom-op path)."""
    B, N = scores.shape
    M = int(nms_max_detections)
    if classes is None:
        classes = jnp.zeros((B, N), jnp.int32)
    classes = classes.astype(jnp.int32)

    scores_f = scores.astype(jnp.float32)
    # Coordinate-major layout [4, B, N]: each coordinate plane is a dense
    # (8, N) tile inside the kernel.
    # TODO(synk): if the upstream producer can emit boxes coordinate-major,
    # this transpose (one extra HBM pass over boxes) disappears entirely.
    boxes_t = jnp.transpose(boxes.astype(jnp.float32), (2, 0, 1))    # [4, B, N]

    BB = _BATCH_BLOCK
    # v7x has 2 TensorCores and grid steps are what get sharded across them;
    # for small batches interleave rows over 2 full 8-sublane blocks so both
    # cores get work.  v5e/v6e (single TC) keep one fully-occupied block.
    split_rows = _is_v7x() and 2 <= B <= BB
    n_blocks = 2 if split_rows else max(1, _round_up(B, BB) // BB)
    B_pad = n_blocks * BB
    if split_rows:
        dest = (jnp.arange(B) % 2) * BB + (jnp.arange(B) // 2)
    else:
        dest = jnp.arange(B)

    if B_pad == B and not split_rows:
        scores_p, boxes_p = scores_f, boxes_t
    else:
        # Padded rows carry -inf scores -> never above the threshold -> dead.
        scores_p = jnp.full((B_pad, N), -jnp.inf, jnp.float32).at[dest].set(scores_f)
        boxes_p = jnp.zeros((4, B_pad, N), jnp.float32).at[:, dest, :].set(boxes_t)

    # One lane-dense int32 output slab per row block.
    W = _round_up(M + 1, 128)

    kernel = functools.partial(
        _nms_kernel,
        iou_threshold=float(iou_threshold),
        score_threshold=float(score_threshold),
        max_detections=M,
    )

    # Double-buffered inputs + output; only raise the scoped-VMEM limit when
    # the footprint for very large N approaches the default.
    need = 2 * (BB * N * 4 + 4 * BB * N * 4) + 2 * BB * W * 4
    vmem_limit = (int(min(need * 1.5 + (8 << 20), 110 << 20))
                  if need > (24 << 20) else None)

    grid_spec = pltpu.PrefetchScalarGridSpec(
        num_scalar_prefetch=0,
        grid=(n_blocks,),
        in_specs=[
            pl.BlockSpec((BB, N), lambda b: (b, 0)),
            pl.BlockSpec((4, BB, N), lambda b: (0, b, 0)),
        ],
        out_specs=pl.BlockSpec((BB, W), lambda b: (b, 0)),
    )

    slab = pl.pallas_call(
        kernel,
        out_shape=jax.ShapeDtypeStruct((B_pad, W), jnp.int32),
        grid_spec=grid_spec,
        compiler_params=pltpu.CompilerParams(
            dimension_semantics=("parallel",),
            vmem_limit_bytes=vmem_limit),
    )(scores_p, boxes_p)

    idx = slab[dest, :M]                     # [B, M] int32
    n_valid = slab[dest, M]                  # [B]    int32

    # Scores / boxes / classes are output-only: recover them with plain
    # gathers in the wrapper instead of in-kernel reductions.
    valid = idx >= 0
    safe_idx = jnp.maximum(idx, 0)
    sel_scores = jnp.where(
        valid, jnp.take_along_axis(scores, safe_idx, axis=1),
        jnp.zeros((), scores.dtype)).astype(scores.dtype)
    box_idx = jnp.broadcast_to(safe_idx[..., None], (B, M, 4))
    sel_boxes = jnp.where(
        valid[..., None], jnp.take_along_axis(boxes, box_idx, axis=1),
        jnp.zeros((), boxes.dtype)).astype(boxes.dtype)
    sel_classes = jnp.where(
        valid, jnp.take_along_axis(classes, safe_idx, axis=1), -1)

    # TODO(synk): reference op returns torch.long (int64) indices; TPU kernel
    # emits int32.
    return [idx, sel_scores, sel_boxes, sel_classes, n_valid]


def _reference_nms(scores, boxes, iou_thr, score_thr, M):
    """Straightforward greedy NMS in numpy float32 (same arithmetic order)."""
    scores = np.asarray(scores, np.float32)
    boxes = np.asarray(boxes, np.float32)
    B, N = scores.shape
    idx_out = np.full((B, M), -1, np.int32)
    cnt = np.zeros((B,), np.int32)
    iou_thr = np.float32(iou_thr)
    score_thr = np.float32(score_thr)
    for b in range(B):
        x1, y1 = boxes[b, :, 0], boxes[b, :, 1]
        x2, y2 = boxes[b, :, 2], boxes[b, :, 3]
        area = (x2 - x1) * (y2 - y1)
        alive = scores[b] > score_thr
        for m in range(M):
            if not alive.any():
                break
            masked = np.where(alive, scores[b], -np.inf)
            j = int(np.argmax(masked))       # ties -> lowest index
            idx_out[b, m] = j
            cnt[b] += 1
            iw = np.maximum(np.minimum(x2, x2[j]) - np.maximum(x1, x1[j]), np.float32(0))
            ih = np.maximum(np.minimum(y2, y2[j]) - np.maximum(y1, y1[j]), np.float32(0))
            inter = iw * ih
            union = area + area[j] - inter
            suppress = inter > iou_thr * union
            alive = alive & ~suppress
            alive[j] = False
    return idx_out, cnt


if __name__ == "__main__":
    key = jax.random.PRNGKey(0)
    k1, k2, k3, k4 = jax.random.split(key, 4)

    B, N, M = 2, 128, 16
    # Scores on a 1/256 grid: the kernel's truncated argmax key is lossless for
    # these values, so the greedy selection order matches the reference exactly
    # (exact ties break to the lowest index on both sides).
    scores = (jax.random.randint(k1, (B, N), 1, 256) / 256.0).astype(jnp.float32)
    xy = jax.random.uniform(k2, (B, N, 2), dtype=jnp.float32, minval=0.0, maxval=0.8)
    wh = jax.random.uniform(k3, (B, N, 2), dtype=jnp.float32, minval=0.05, maxval=0.3)
    boxes = jnp.concatenate([xy, xy + wh], axis=-1)           # (x1, y1, x2, y2)
    classes = jax.random.randint(k4, (B, N), 0, 4, dtype=jnp.int32)

    iou_thr, score_thr = 0.5, 0.3
    outs = nms(scores, boxes, classes, iou_threshold=iou_thr,
               score_threshold=score_thr, nms_max_detections=M)
    outs = jax.block_until_ready(outs)
    idx, sc, bx, cl, n_valid = [np.asarray(o) for o in outs]

    assert idx.shape == (B, M) and sc.shape == (B, M)
    assert bx.shape == (B, M, 4) and cl.shape == (B, M) and n_valid.shape == (B,)

    ref_idx, ref_cnt = _reference_nms(np.asarray(scores), np.asarray(boxes),
                                      iou_thr, score_thr, M)
    assert np.array_equal(idx, ref_idx), (idx, ref_idx)
    assert np.array_equal(n_valid, ref_cnt), (n_valid, ref_cnt)

    valid = ref_idx >= 0
    safe = np.maximum(ref_idx, 0)
    exp_sc = np.where(valid, np.take_along_axis(np.asarray(scores), safe, axis=1), 0.0)
    exp_bx = np.where(
        valid[..., None],
        np.take_along_axis(np.asarray(boxes),
                           np.broadcast_to(safe[..., None], (B, M, 4)), axis=1), 0.0)
    exp_cl = np.where(valid, np.take_along_axis(np.asarray(classes), safe, axis=1), -1)
    assert np.allclose(sc, exp_sc)
    assert np.allclose(bx, exp_bx)
    assert np.array_equal(cl, exp_cl)

    print("KERNEL_OK")
</pallas_src>

<mosaic_0001>
module attributes {stable_mosaic.version = 11 : i64} {
  func.func @_nms_kernel(%arg0: i32, %arg1: memref<8x128xf32, #tpu.memory_space<vmem>>, %arg2: memref<4x8x128xf32, #tpu.memory_space<vmem>>, %arg3: memref<8x128xi32, #tpu.memory_space<vmem>>) attributes {dimension_semantics = [#tpu.dimension_semantics<parallel>], iteration_bounds = array<i64: 1>, scalar_prefetch = 0 : i64, scratch_operands = 0 : i64, tpu.core_type = #tpu.core_type<tc>, window_params = [{transform_indices = @transform_0, window_bounds = array<i64: 8, 128>}, {transform_indices = @transform_1, window_bounds = array<i64: 4, 8, 128>}, {transform_indices = @transform_2, window_bounds = array<i64: 8, 128>}]} {
    %c0 = arith.constant 0 : index
    %c0_0 = arith.constant 0 : index
    %0 = vector.load %arg1[%c0, %c0_0] : memref<8x128xf32, #tpu.memory_space<vmem>>, vector<8x128xf32>
    %c0_1 = arith.constant 0 : index
    %c0_2 = arith.constant 0 : index
    %c0_3 = arith.constant 0 : index
    %1 = vector.load %arg2[%c0_1, %c0_2, %c0_3] : memref<4x8x128xf32, #tpu.memory_space<vmem>>, vector<1x8x128xf32>
    %2 = vector.shape_cast %1 : vector<1x8x128xf32> to vector<8x128xf32>
    %c1 = arith.constant 1 : index
    %c0_4 = arith.constant 0 : index
    %c0_5 = arith.constant 0 : index
    %3 = vector.load %arg2[%c1, %c0_4, %c0_5] : memref<4x8x128xf32, #tpu.memory_space<vmem>>, vector<1x8x128xf32>
    %4 = vector.shape_cast %3 : vector<1x8x128xf32> to vector<8x128xf32>
    %c2 = arith.constant 2 : index
    %c0_6 = arith.constant 0 : index
    %c0_7 = arith.constant 0 : index
    %5 = vector.load %arg2[%c2, %c0_6, %c0_7] : memref<4x8x128xf32, #tpu.memory_space<vmem>>, vector<1x8x128xf32>
    %6 = vector.shape_cast %5 : vector<1x8x128xf32> to vector<8x128xf32>
    %c3 = arith.constant 3 : index
    %c0_8 = arith.constant 0 : index
    %c0_9 = arith.constant 0 : index
    %7 = vector.load %arg2[%c3, %c0_8, %c0_9] : memref<4x8x128xf32, #tpu.memory_space<vmem>>, vector<1x8x128xf32>
    %8 = vector.shape_cast %7 : vector<1x8x128xf32> to vector<8x128xf32>
    %9 = arith.subf %6, %2 : vector<8x128xf32>
    %10 = arith.subf %8, %4 : vector<8x128xf32>
    %11 = arith.mulf %9, %10 : vector<8x128xf32>
    %12 = tpu.iota {dimensions = array<i32: 1>} : vector<8x128xi32>
    %13 = tpu.iota {dimensions = array<i32: 1>} : vector<8x128xi32>
    %14 = tpu.bitcast %0 : vector<8x128xf32> -> vector<8x128xi32>
    %c0_i32 = arith.constant 0 : i32
    %15 = vector.broadcast %c0_i32 : i32 to vector<8x128xi32>
    %16 = arith.cmpi slt, %14, %15 : vector<8x128xi32>
    %c2147483647_i32 = arith.constant 2147483647 : i32
    %17 = vector.broadcast %c2147483647_i32 : i32 to vector<8x128xi32>
    %18 = arith.xori %14, %17 : vector<8x128xi32>
    %19 = arith.select %16, %18, %14 : vector<8x128xi1>, vector<8x128xi32>
    %c127_i32 = arith.constant 127 : i32
    %20 = vector.broadcast %c127_i32 : i32 to vector<8x128xi32>
    %21 = arith.subi %20, %12 : vector<8x128xi32>
    %c7_i32 = arith.constant 7 : i32
    %22 = vector.broadcast %c7_i32 : i32 to vector<8x128xi32>
    %23 = arith.shrsi %19, %22 : vector<8x128xi32>
    %c7_i32_10 = arith.constant 7 : i32
    %24 = vector.broadcast %c7_i32_10 : i32 to vector<8x128xi32>
    %25 = arith.shli %23, %24 : vector<8x128xi32>
    %26 = arith.ori %25, %21 : vector<8x128xi32>
    %cst = arith.constant 3.000000e-01 : f32
    %27 = vector.broadcast %cst : f32 to vector<8x128xf32>
    %28 = arith.cmpf ogt, %0, %27 : vector<8x128xf32>
    %c-2147483648_i32 = arith.constant -2147483648 : i32
    %29 = vector.broadcast %c-2147483648_i32 : i32 to vector<8x128xi32>
    %30 = arith.select %28, %26, %29 : vector<8x128xi1>, vector<8x128xi32>
    %c16_i32 = arith.constant 16 : i32
    %31 = vector.broadcast %c16_i32 : i32 to vector<8x128xi32>
    %32 = arith.cmpi slt, %13, %31 : vector<8x128xi32>
    %c-1_i32 = arith.constant -1 : i32
    %c0_i32_11 = arith.constant 0 : i32
    %33 = vector.broadcast %c-1_i32 : i32 to vector<8x128xi32>
    %34 = vector.broadcast %c0_i32_11 : i32 to vector<8x128xi32>
    %35 = arith.select %32, %33, %34 : vector<8x128xi1>, vector<8x128xi32>
    %c0_i32_12 = arith.constant 0 : i32
    %36 = vector.broadcast %c0_i32_12 : i32 to vector<8x1xi32>
    %c-2147483648_i32_13 = arith.constant -2147483648 : i32
    %c0_i32_14 = arith.constant 0 : i32
    %cst_15 = arith.constant dense<-2147483648> : vector<8xi32>
    %37 = vector.multi_reduction <maxsi>, %30, %cst_15 [1] : vector<8x128xi32> to vector<8xi32>
    %38 = vector.shape_cast %37 : vector<8xi32> to vector<8x1xi32>
    %39 = vector.broadcast %c-2147483648_i32_13 : i32 to vector<8x1xi32>
    %40 = arith.cmpi sgt, %38, %39 : vector<8x1xi32>
    %c127_i32_16 = arith.constant 127 : i32
    %41 = vector.broadcast %c127_i32_16 : i32 to vector<8x1xi32>
    %42 = arith.andi %38, %41 : vector<8x1xi32>
    %c127_i32_17 = arith.constant 127 : i32
    %43 = vector.broadcast %c127_i32_17 : i32 to vector<8x1xi32>
    %44 = arith.subi %43, %42 : vector<8x1xi32>
    %45 = vector.broadcast %44 : vector<8x1xi32> to vector<8x128xi32>
    %46 = arith.cmpi eq, %12, %45 : vector<8x128xi32>
    %cst_18 = arith.constant 0.000000e+00 : f32
    %47 = vector.broadcast %cst_18 : f32 to vector<8x128xf32>
    %48 = arith.select %46, %2, %47 : vector<8x128xi1>, vector<8x128xf32>
    %cst_19 = arith.constant dense<0.000000e+00> : vector<8xf32>
    %49 = vector.multi_reduction <add>, %48, %cst_19 [1] : vector<8x128xf32> to vector<8xf32>
    %50 = vector.shape_cast %49 : vector<8xf32> to vector<8x1xf32>
    %cst_20 = arith.constant 0.000000e+00 : f32
    %51 = vector.broadcast %cst_20 : f32 to vector<8x128xf32>
    %52 = arith.select %46, %4, %51 : vector<8x128xi1>, vector<8x128xf32>
    %cst_21 = arith.constant dense<0.000000e+00> : vector<8xf32>
    %53 = vector.multi_reduction <add>, %52, %cst_21 [1] : vector<8x128xf32> to vector<8xf32>
    %54 = vector.shape_cast %53 : vector<8xf32> to vector<8x1xf32>
    %cst_22 = arith.constant 0.000000e+00 : f32
    %55 = vector.broadcast %cst_22 : f32 to vector<8x128xf32>
    %56 = arith.select %46, %6, %55 : vector<8x128xi1>, vector<8x128xf32>
    %cst_23 = arith.constant dense<0.000000e+00> : vector<8xf32>
    %57 = vector.multi_reduction <add>, %56, %cst_23 [1] : vector<8x128xf32> to vector<8xf32>
    %58 = vector.shape_cast %57 : vector<8xf32> to vector<8x1xf32>
    %cst_24 = arith.constant 0.000000e+00 : f32
    %59 = vector.broadcast %cst_24 : f32 to vector<8x128xf32>
    %60 = arith.select %46, %8, %59 : vector<8x128xi1>, vector<8x128xf32>
    %cst_25 = arith.constant dense<0.000000e+00> : vector<8xf32>
    %61 = vector.multi_reduction <add>, %60, %cst_25 [1] : vector<8x128xf32> to vector<8xf32>
    %62 = vector.shape_cast %61 : vector<8xf32> to vector<8x1xf32>
    %63 = arith.subf %58, %50 : vector<8x1xf32>
    %64 = arith.subf %62, %54 : vector<8x1xf32>
    %65 = arith.mulf %63, %64 : vector<8x1xf32>
    %66 = vector.broadcast %58 : vector<8x1xf32> to vector<8x128xf32>
    %67 = arith.minimumf %6, %66 : vector<8x128xf32>
    %68 = vector.broadcast %50 : vector<8x1xf32> to vector<8x128xf32>
    %69 = arith.maximumf %2, %68 : vector<8x128xf32>
    %70 = arith.subf %67, %69 : vector<8x128xf32>
    %cst_26 = arith.constant 0.000000e+00 : f32
    %71 = vector.broadcast %cst_26 : f32 to vector<8x128xf32>
    %72 = arith.maximumf %70, %71 : vector<8x128xf32>
    %73 = vector.broadcast %62 : vector<8x1xf32> to vector<8x128xf32>
    %74 = arith.minimumf %8, %73 : vector<8x128xf32>
    %75 = vector.broadcast %54 : vector<8x1xf32> to vector<8x128xf32>
    %76 = arith.maximumf %4, %75 : vector<8x128xf32>
    %77 = arith.subf %74, %76 : vector<8x128xf32>
    %cst_27 = arith.constant 0.000000e+00 : f32
    %78 = vector.broadcast %cst_27 : f32 to vector<8x128xf32>
    %79 = arith.maximumf %77, %78 : vector<8x128xf32>
    %80 = arith.mulf %72, %79 : vector<8x128xf32>
    %81 = vector.broadcast %65 : vector<8x1xf32> to vector<8x128xf32>
    %82 = arith.addf %11, %81 : vector<8x128xf32>
    %83 = arith.subf %82, %80 : vector<8x128xf32>
    %cst_28 = arith.constant 5.000000e-01 : f32
    %84 = vector.broadcast %cst_28 : f32 to vector<8x128xf32>
    %85 = arith.mulf %84, %83 : vector<8x128xf32>
    %86 = arith.cmpf ogt, %80, %85 : vector<8x128xf32>
    %87 = arith.ori %86, %46 : vector<8x128xi1>
    %88 = vector.broadcast %c-2147483648_i32_13 : i32 to vector<8x128xi32>
    %89 = arith.select %87, %88, %30 : vector<8x128xi1>, vector<8x128xi32>
    %90 = vector.broadcast %c0_i32_14 : i32 to vector<8x128xi32>
    %91 = arith.cmpi eq, %13, %90 : vector<8x128xi32>
    %92 = vector.broadcast %40 : vector<8x1xi1> to vector<8x128xi1>
    %93 = arith.andi %91, %92 : vector<8x128xi1>
    %94 = vector.shape_cast %44 : vector<8x1xi32> to vector<8x1xi32>
    %95 = vector.broadcast %94 : vector<8x1xi32> to vector<8x128xi32>
    %96 = arith.select %93, %95, %35 : vector<8x128xi1>, vector<8x128xi32>
    %97 = arith.extui %40 : vector<8x1xi1> to vector<8x1xi32>
    %98 = arith.addi %36, %97 : vector<8x1xi32>
    %c1_i32 = arith.constant 1 : i32
    %cst_29 = arith.constant dense<-2147483648> : vector<8xi32>
    %99 = vector.multi_reduction <maxsi>, %89, %cst_29 [1] : vector<8x128xi32> to vector<8xi32>
    %100 = vector.shape_cast %99 : vector<8xi32> to vector<8x1xi32>
    %101 = vector.broadcast %c-2147483648_i32_13 : i32 to vector<8x1xi32>
    %102 = arith.cmpi sgt, %100, %101 : vector<8x1xi32>
    %c127_i32_30 = arith.constant 127 : i32
    %103 = vector.broadcast %c127_i32_30 : i32 to vector<8x1xi32>
    %104 = arith.andi %100, %103 : vector<8x1xi32>
    %c127_i32_31 = arith.constant 127 : i32
    %105 = vector.broadcast %c127_i32_31 : i32 to vector<8x1xi32>
    %106 = arith.subi %105, %104 : vector<8x1xi32>
    %107 = vector.broadcast %106 : vector<8x1xi32> to vector<8x128xi32>
    %108 = arith.cmpi eq, %12, %107 : vector<8x128xi32>
    %cst_32 = arith.constant 0.000000e+00 : f32
    %109 = vector.broadcast %cst_32 : f32 to vector<8x128xf32>
    %110 = arith.select %108, %2, %109 : vector<8x128xi1>, vector<8x128xf32>
    %cst_33 = arith.constant dense<0.000000e+00> : vector<8xf32>
    %111 = vector.multi_reduction <add>, %110, %cst_33 [1] : vector<8x128xf32> to vector<8xf32>
    %112 = vector.shape_cast %111 : vector<8xf32> to vector<8x1xf32>
    %cst_34 = arith.constant 0.000000e+00 : f32
    %113 = vector.broadcast %cst_34 : f32 to vector<8x128xf32>
    %114 = arith.select %108, %4, %113 : vector<8x128xi1>, vector<8x128xf32>
    %cst_35 = arith.constant dense<0.000000e+00> : vector<8xf32>
    %115 = vector.multi_reduction <add>, %114, %cst_35 [1] : vector<8x128xf32> to vector<8xf32>
    %116 = vector.shape_cast %115 : vector<8xf32> to vector<8x1xf32>
    %cst_36 = arith.constant 0.000000e+00 : f32
    %117 = vector.broadcast %cst_36 : f32 to vector<8x128xf32>
    %118 = arith.select %108, %6, %117 : vector<8x128xi1>, vector<8x128xf32>
    %cst_37 = arith.constant dense<0.000000e+00> : vector<8xf32>
    %119 = vector.multi_reduction <add>, %118, %cst_37 [1] : vector<8x128xf32> to vector<8xf32>
    %120 = vector.shape_cast %119 : vector<8xf32> to vector<8x1xf32>
    %cst_38 = arith.constant 0.000000e+00 : f32
    %121 = vector.broadcast %cst_38 : f32 to vector<8x128xf32>
    %122 = arith.select %108, %8, %121 : vector<8x128xi1>, vector<8x128xf32>
    %cst_39 = arith.constant dense<0.000000e+00> : vector<8xf32>
    %123 = vector.multi_reduction <add>, %122, %cst_39 [1] : vector<8x128xf32> to vector<8xf32>
    %124 = vector.shape_cast %123 : vector<8xf32> to vector<8x1xf32>
    %125 = arith.subf %120, %112 : vector<8x1xf32>
    %126 = arith.subf %124, %116 : vector<8x1xf32>
    %127 = arith.mulf %125, %126 : vector<8x1xf32>
    %128 = vector.broadcast %120 : vector<8x1xf32> to vector<8x128xf32>
    %129 = arith.minimumf %6, %128 : vector<8x128xf32>
    %130 = vector.broadcast %112 : vector<8x1xf32> to vector<8x128xf32>
    %131 = arith.maximumf %2, %130 : vector<8x128xf32>
    %132 = arith.subf %129, %131 : vector<8x128xf32>
    %cst_40 = arith.constant 0.000000e+00 : f32
    %133 = vector.broadcast %cst_40 : f32 to vector<8x128xf32>
    %134 = arith.maximumf %132, %133 : vector<8x128xf32>
    %135 = vector.broadcast %124 : vector<8x1xf32> to vector<8x128xf32>
    %136 = arith.minimumf %8, %135 : vector<8x128xf32>
    %137 = vector.broadcast %116 : vector<8x1xf32> to vector<8x128xf32>
    %138 = arith.maximumf %4, %137 : vector<8x128xf32>
    %139 = arith.subf %136, %138 : vector<8x128xf32>
    %cst_41 = arith.constant 0.000000e+00 : f32
    %140 = vector.broadcast %cst_41 : f32 to vector<8x128xf32>
    %141 = arith.maximumf %139, %140 : vector<8x128xf32>
    %142 = arith.mulf %134, %141 : vector<8x128xf32>
    %143 = vector.broadcast %127 : vector<8x1xf32> to vector<8x128xf32>
    %144 = arith.addf %11, %143 : vector<8x128xf32>
    %145 = arith.subf %144, %142 : vector<8x128xf32>
    %cst_42 = arith.constant 5.000000e-01 : f32
    %146 = vector.broadcast %cst_42 : f32 to vector<8x128xf32>
    %147 = arith.mulf %146, %145 : vector<8x128xf32>
    %148 = arith.cmpf ogt, %142, %147 : vector<8x128xf32>
    %149 = arith.ori %148, %108 : vector<8x128xi1>
    %150 = vector.broadcast %c-2147483648_i32_13 : i32 to vector<8x128xi32>
    %151 = arith.select %149, %150, %89 : vector<8x128xi1>, vector<8x128xi32>
    %152 = vector.broadcast %c1_i32 : i32 to vector<8x128xi32>
    %153 = arith.cmpi eq, %13, %152 : vector<8x128xi32>
    %154 = vector.broadcast %102 : vector<8x1xi1> to vector<8x128xi1>
    %155 = arith.andi %153, %154 : vector<8x128xi1>
    %156 = vector.shape_cast %106 : vector<8x1xi32> to vector<8x1xi32>
    %157 = vector.broadcast %156 : vector<8x1xi32> to vector<8x128xi32>
    %158 = arith.select %155, %157, %96 : vector<8x128xi1>, vector<8x128xi32>
    %159 = arith.extui %102 : vector<8x1xi1> to vector<8x1xi32>
    %160 = arith.addi %98, %159 : vector<8x1xi32>
    %c2_i32 = arith.constant 2 : i32
    %cst_43 = arith.constant dense<-2147483648> : vector<8xi32>
    %161 = vector.multi_reduction <maxsi>, %151, %cst_43 [1] : vector<8x128xi32> to vector<8xi32>
    %162 = vector.shape_cast %161 : vector<8xi32> to vector<8x1xi32>
    %163 = vector.broadcast %c-2147483648_i32_13 : i32 to vector<8x1xi32>
    %164 = arith.cmpi sgt, %162, %163 : vector<8x1xi32>
    %c127_i32_44 = arith.constant 127 : i32
    %165 = vector.broadcast %c127_i32_44 : i32 to vector<8x1xi32>
    %166 = arith.andi %162, %165 : vector<8x1xi32>
    %c127_i32_45 = arith.constant 127 : i32
    %167 = vector.broadcast %c127_i32_45 : i32 to vector<8x1xi32>
    %168 = arith.subi %167, %166 : vector<8x1xi32>
    %169 = vector.broadcast %168 : vector<8x1xi32> to vector<8x128xi32>
    %170 = arith.cmpi eq, %12, %169 : vector<8x128xi32>
    %cst_46 = arith.constant 0.000000e+00 : f32
    %171 = vector.broadcast %cst_46 : f32 to vector<8x128xf32>
    %172 = arith.select %170, %2, %171 : vector<8x128xi1>, vector<8x128xf32>
    %cst_47 = arith.constant dense<0.000000e+00> : vector<8xf32>
    %173 = vector.multi_reduction <add>, %172, %cst_47 [1] : vector<8x128xf32> to vector<8xf32>
    %174 = vector.shape_cast %173 : vector<8xf32> to vector<8x1xf32>
    %cst_48 = arith.constant 0.000000e+00 : f32
    %175 = vector.broadcast %cst_48 : f32 to vector<8x128xf32>
    %176 = arith.select %170, %4, %175 : vector<8x128xi1>, vector<8x128xf32>
    %cst_49 = arith.constant dense<0.000000e+00> : vector<8xf32>
    %177 = vector.multi_reduction <add>, %176, %cst_49 [1] : vector<8x128xf32> to vector<8xf32>
    %178 = vector.shape_cast %177 : vector<8xf32> to vector<8x1xf32>
    %cst_50 = arith.constant 0.000000e+00 : f32
    %179 = vector.broadcast %cst_50 : f32 to vector<8x128xf32>
    %180 = arith.select %170, %6, %179 : vector<8x128xi1>, vector<8x128xf32>
    %cst_51 = arith.constant dense<0.000000e+00> : vector<8xf32>
    %181 = vector.multi_reduction <add>, %180, %cst_51 [1] : vector<8x128xf32> to vector<8xf32>
    %182 = vector.shape_cast %181 : vector<8xf32> to vector<8x1xf32>
    %cst_52 = arith.constant 0.000000e+00 : f32
    %183 = vector.broadcast %cst_52 : f32 to vector<8x128xf32>
    %184 = arith.select %170, %8, %183 : vector<8x128xi1>, vector<8x128xf32>
    %cst_53 = arith.constant dense<0.000000e+00> : vector<8xf32>
    %185 = vector.multi_reduction <add>, %184, %cst_53 [1] : vector<8x128xf32> to vector<8xf32>
    %186 = vector.shape_cast %185 : vector<8xf32> to vector<8x1xf32>
    %187 = arith.subf %182, %174 : vector<8x1xf32>
    %188 = arith.subf %186, %178 : vector<8x1xf32>
    %189 = arith.mulf %187, %188 : vector<8x1xf32>
    %190 = vector.broadcast %182 : vector<8x1xf32> to vector<8x128xf32>
    %191 = arith.minimumf %6, %190 : vector<8x128xf32>
    %192 = vector.broadcast %174 : vector<8x1xf32> to vector<8x128xf32>
    %193 = arith.maximumf %2, %192 : vector<8x128xf32>
    %194 = arith.subf %191, %193 : vector<8x128xf32>
    %cst_54 = arith.constant 0.000000e+00 : f32
    %195 = vector.broadcast %cst_54 : f32 to vector<8x128xf32>
    %196 = arith.maximumf %194, %195 : vector<8x128xf32>
    %197 = vector.broadcast %186 : vector<8x1xf32> to vector<8x128xf32>
    %198 = arith.minimumf %8, %197 : vector<8x128xf32>
    %199 = vector.broadcast %178 : vector<8x1xf32> to vector<8x128xf32>
    %200 = arith.maximumf %4, %199 : vector<8x128xf32>
    %201 = arith.subf %198, %200 : vector<8x128xf32>
    %cst_55 = arith.constant 0.000000e+00 : f32
    %202 = vector.broadcast %cst_55 : f32 to vector<8x128xf32>
    %203 = arith.maximumf %201, %202 : vector<8x128xf32>
    %204 = arith.mulf %196, %203 : vector<8x128xf32>
    %205 = vector.broadcast %189 : vector<8x1xf32> to vector<8x128xf32>
    %206 = arith.addf %11, %205 : vector<8x128xf32>
    %207 = arith.subf %206, %204 : vector<8x128xf32>
    %cst_56 = arith.constant 5.000000e-01 : f32
    %208 = vector.broadcast %cst_56 : f32 to vector<8x128xf32>
    %209 = arith.mulf %208, %207 : vector<8x128xf32>
    %210 = arith.cmpf ogt, %204, %209 : vector<8x128xf32>
    %211 = arith.ori %210, %170 : vector<8x128xi1>
    %212 = vector.broadcast %c-2147483648_i32_13 : i32 to vector<8x128xi32>
    %213 = arith.select %211, %212, %151 : vector<8x128xi1>, vector<8x128xi32>
    %214 = vector.broadcast %c2_i32 : i32 to vector<8x128xi32>
    %215 = arith.cmpi eq, %13, %214 : vector<8x128xi32>
    %216 = vector.broadcast %164 : vector<8x1xi1> to vector<8x128xi1>
    %217 = arith.andi %215, %216 : vector<8x128xi1>
    %218 = vector.shape_cast %168 : vector<8x1xi32> to vector<8x1xi32>
    %219 = vector.broadcast %218 : vector<8x1xi32> to vector<8x128xi32>
    %220 = arith.select %217, %219, %158 : vector<8x128xi1>, vector<8x128xi32>
    %221 = arith.extui %164 : vector<8x1xi1> to vector<8x1xi32>
    %222 = arith.addi %160, %221 : vector<8x1xi32>
    %c3_i32 = arith.constant 3 : i32
    %cst_57 = arith.constant dense<-2147483648> : vector<8xi32>
    %223 = vector.multi_reduction <maxsi>, %213, %cst_57 [1] : vector<8x128xi32> to vector<8xi32>
    %224 = vector.shape_cast %223 : vector<8xi32> to vector<8x1xi32>
    %225 = vector.broadcast %c-2147483648_i32_13 : i32 to vector<8x1xi32>
    %226 = arith.cmpi sgt, %224, %225 : vector<8x1xi32>
    %c127_i32_58 = arith.constant 127 : i32
    %227 = vector.broadcast %c127_i32_58 : i32 to vector<8x1xi32>
    %228 = arith.andi %224, %227 : vector<8x1xi32>
    %c127_i32_59 = arith.constant 127 : i32
    %229 = vector.broadcast %c127_i32_59 : i32 to vector<8x1xi32>
    %230 = arith.subi %229, %228 : vector<8x1xi32>
    %231 = vector.broadcast %230 : vector<8x1xi32> to vector<8x128xi32>
    %232 = arith.cmpi eq, %12, %231 : vector<8x128xi32>
    %cst_60 = arith.constant 0.000000e+00 : f32
    %233 = vector.broadcast %cst_60 : f32 to vector<8x128xf32>
    %234 = arith.select %232, %2, %233 : vector<8x128xi1>, vector<8x128xf32>
    %cst_61 = arith.constant dense<0.000000e+00> : vector<8xf32>
    %235 = vector.multi_reduction <add>, %234, %cst_61 [1] : vector<8x128xf32> to vector<8xf32>
    %236 = vector.shape_cast %235 : vector<8xf32> to vector<8x1xf32>
    %cst_62 = arith.constant 0.000000e+00 : f32
    %237 = vector.broadcast %cst_62 : f32 to vector<8x128xf32>
    %238 = arith.select %232, %4, %237 : vector<8x128xi1>, vector<8x128xf32>
    %cst_63 = arith.constant dense<0.000000e+00> : vector<8xf32>
    %239 = vector.multi_reduction <add>, %238, %cst_63 [1] : vector<8x128xf32> to vector<8xf32>
    %240 = vector.shape_cast %239 : vector<8xf32> to vector<8x1xf32>
    %cst_64 = arith.constant 0.000000e+00 : f32
    %241 = vector.broadcast %cst_64 : f32 to vector<8x128xf32>
    %242 = arith.select %232, %6, %241 : vector<8x128xi1>, vector<8x128xf32>
    %cst_65 = arith.constant dense<0.000000e+00> : vector<8xf32>
    %243 = vector.multi_reduction <add>, %242, %cst_65 [1] : vector<8x128xf32> to vector<8xf32>
    %244 = vector.shape_cast %243 : vector<8xf32> to vector<8x1xf32>
    %cst_66 = arith.constant 0.000000e+00 : f32
    %245 = vector.broadcast %cst_66 : f32 to vector<8x128xf32>
    %246 = arith.select %232, %8, %245 : vector<8x128xi1>, vector<8x128xf32>
    %cst_67 = arith.constant dense<0.000000e+00> : vector<8xf32>
    %247 = vector.multi_reduction <add>, %246, %cst_67 [1] : vector<8x128xf32> to vector<8xf32>
    %248 = vector.shape_cast %247 : vector<8xf32> to vector<8x1xf32>
    %249 = arith.subf %244, %236 : vector<8x1xf32>
    %250 = arith.subf %248, %240 : vector<8x1xf32>
    %251 = arith.mulf %249, %250 : vector<8x1xf32>
    %252 = vector.broadcast %244 : vector<8x1xf32> to vector<8x128xf32>
    %253 = arith.minimumf %6, %252 : vector<8x128xf32>
    %254 = vector.broadcast %236 : vector<8x1xf32> to vector<8x128xf32>
    %255 = arith.maximumf %2, %254 : vector<8x128xf32>
    %256 = arith.subf %253, %255 : vector<8x128xf32>
    %cst_68 = arith.constant 0.000000e+00 : f32
    %257 = vector.broadcast %cst_68 : f32 to vector<8x128xf32>
    %258 = arith.maximumf %256, %257 : vector<8x128xf32>
    %259 = vector.broadcast %248 : vector<8x1xf32> to vector<8x128xf32>
    %260 = arith.minimumf %8, %259 : vector<8x128xf32>
    %261 = vector.broadcast %240 : vector<8x1xf32> to vector<8x128xf32>
    %262 = arith.maximumf %4, %261 : vector<8x128xf32>
    %263 = arith.subf %260, %262 : vector<8x128xf32>
    %cst_69 = arith.constant 0.000000e+00 : f32
    %264 = vector.broadcast %cst_69 : f32 to vector<8x128xf32>
    %265 = arith.maximumf %263, %264 : vector<8x128xf32>
    %266 = arith.mulf %258, %265 : vector<8x128xf32>
    %267 = vector.broadcast %251 : vector<8x1xf32> to vector<8x128xf32>
    %268 = arith.addf %11, %267 : vector<8x128xf32>
    %269 = arith.subf %268, %266 : vector<8x128xf32>
    %cst_70 = arith.constant 5.000000e-01 : f32
    %270 = vector.broadcast %cst_70 : f32 to vector<8x128xf32>
    %271 = arith.mulf %270, %269 : vector<8x128xf32>
    %272 = arith.cmpf ogt, %266, %271 : vector<8x128xf32>
    %273 = arith.ori %272, %232 : vector<8x128xi1>
    %274 = vector.broadcast %c-2147483648_i32_13 : i32 to vector<8x128xi32>
    %275 = arith.select %273, %274, %213 : vector<8x128xi1>, vector<8x128xi32>
    %276 = vector.broadcast %c3_i32 : i32 to vector<8x128xi32>
    %277 = arith.cmpi eq, %13, %276 : vector<8x128xi32>
    %278 = vector.broadcast %226 : vector<8x1xi1> to vector<8x128xi1>
    %279 = arith.andi %277, %278 : vector<8x128xi1>
    %280 = vector.shape_cast %230 : vector<8x1xi32> to vector<8x1xi32>
    %281 = vector.broadcast %280 : vector<8x1xi32> to vector<8x128xi32>
    %282 = arith.select %279, %281, %220 : vector<8x128xi1>, vector<8x128xi32>
    %283 = arith.extui %226 : vector<8x1xi1> to vector<8x1xi32>
    %284 = arith.addi %222, %283 : vector<8x1xi32>
    %c4_i32 = arith.constant 4 : i32
    %cst_71 = arith.constant dense<-2147483648> : vector<8xi32>
    %285 = vector.multi_reduction <maxsi>, %275, %cst_71 [1] : vector<8x128xi32> to vector<8xi32>
    %286 = vector.shape_cast %285 : vector<8xi32> to vector<8x1xi32>
    %287 = vector.broadcast %c-2147483648_i32_13 : i32 to vector<8x1xi32>
    %288 = arith.cmpi sgt, %286, %287 : vector<8x1xi32>
    %c127_i32_72 = arith.constant 127 : i32
    %289 = vector.broadcast %c127_i32_72 : i32 to vector<8x1xi32>
    %290 = arith.andi %286, %289 : vector<8x1xi32>
    %c127_i32_73 = arith.constant 127 : i32
    %291 = vector.broadcast %c127_i32_73 : i32 to vector<8x1xi32>
    %292 = arith.subi %291, %290 : vector<8x1xi32>
    %293 = vector.broadcast %292 : vector<8x1xi32> to vector<8x128xi32>
    %294 = arith.cmpi eq, %12, %293 : vector<8x128xi32>
    %cst_74 = arith.constant 0.000000e+00 : f32
    %295 = vector.broadcast %cst_74 : f32 to vector<8x128xf32>
    %296 = arith.select %294, %2, %295 : vector<8x128xi1>, vector<8x128xf32>
    %cst_75 = arith.constant dense<0.000000e+00> : vector<8xf32>
    %297 = vector.multi_reduction <add>, %296, %cst_75 [1] : vector<8x128xf32> to vector<8xf32>
    %298 = vector.shape_cast %297 : vector<8xf32> to vector<8x1xf32>
    %cst_76 = arith.constant 0.000000e+00 : f32
    %299 = vector.broadcast %cst_76 : f32 to vector<8x128xf32>
    %300 = arith.select %294, %4, %299 : vector<8x128xi1>, vector<8x128xf32>
    %cst_77 = arith.constant dense<0.000000e+00> : vector<8xf32>
    %301 = vector.multi_reduction <add>, %300, %cst_77 [1] : vector<8x128xf32> to vector<8xf32>
    %302 = vector.shape_cast %301 : vector<8xf32> to vector<8x1xf32>
    %cst_78 = arith.constant 0.000000e+00 : f32
    %303 = vector.broadcast %cst_78 : f32 to vector<8x128xf32>
    %304 = arith.select %294, %6, %303 : vector<8x128xi1>, vector<8x128xf32>
    %cst_79 = arith.constant dense<0.000000e+00> : vector<8xf32>
    %305 = vector.multi_reduction <add>, %304, %cst_79 [1] : vector<8x128xf32> to vector<8xf32>
    %306 = vector.shape_cast %305 : vector<8xf32> to vector<8x1xf32>
    %cst_80 = arith.constant 0.000000e+00 : f32
    %307 = vector.broadcast %cst_80 : f32 to vector<8x128xf32>
    %308 = arith.select %294, %8, %307 : vector<8x128xi1>, vector<8x128xf32>
    %cst_81 = arith.constant dense<0.000000e+00> : vector<8xf32>
    %309 = vector.multi_reduction <add>, %308, %cst_81 [1] : vector<8x128xf32> to vector<8xf32>
    %310 = vector.shape_cast %309 : vector<8xf32> to vector<8x1xf32>
    %311 = arith.subf %306, %298 : vector<8x1xf32>
    %312 = arith.subf %310, %302 : vector<8x1xf32>
    %313 = arith.mulf %311, %312 : vector<8x1xf32>
    %314 = vector.broadcast %306 : vector<8x1xf32> to vector<8x128xf32>
    %315 = arith.minimumf %6, %314 : vector<8x128xf32>
    %316 = vector.broadcast %298 : vector<8x1xf32> to vector<8x128xf32>
    %317 = arith.maximumf %2, %316 : vector<8x128xf32>
    %318 = arith.subf %315, %317 : vector<8x128xf32>
    %cst_82 = arith.constant 0.000000e+00 : f32
    %319 = vector.broadcast %cst_82 : f32 to vector<8x128xf32>
    %320 = arith.maximumf %318, %319 : vector<8x128xf32>
    %321 = vector.broadcast %310 : vector<8x1xf32> to vector<8x128xf32>
    %322 = arith.minimumf %8, %321 : vector<8x128xf32>
    %323 = vector.broadcast %302 : vector<8x1xf32> to vector<8x128xf32>
    %324 = arith.maximumf %4, %323 : vector<8x128xf32>
    %325 = arith.subf %322, %324 : vector<8x128xf32>
    %cst_83 = arith.constant 0.000000e+00 : f32
    %326 = vector.broadcast %cst_83 : f32 to vector<8x128xf32>
    %327 = arith.maximumf %325, %326 : vector<8x128xf32>
    %328 = arith.mulf %320, %327 : vector<8x128xf32>
    %329 = vector.broadcast %313 : vector<8x1xf32> to vector<8x128xf32>
    %330 = arith.addf %11, %329 : vector<8x128xf32>
    %331 = arith.subf %330, %328 : vector<8x128xf32>
    %cst_84 = arith.constant 5.000000e-01 : f32
    %332 = vector.broadcast %cst_84 : f32 to vector<8x128xf32>
    %333 = arith.mulf %332, %331 : vector<8x128xf32>
    %334 = arith.cmpf ogt, %328, %333 : vector<8x128xf32>
    %335 = arith.ori %334, %294 : vector<8x128xi1>
    %336 = vector.broadcast %c-2147483648_i32_13 : i32 to vector<8x128xi32>
    %337 = arith.select %335, %336, %275 : vector<8x128xi1>, vector<8x128xi32>
    %338 = vector.broadcast %c4_i32 : i32 to vector<8x128xi32>
    %339 = arith.cmpi eq, %13, %338 : vector<8x128xi32>
    %340 = vector.broadcast %288 : vector<8x1xi1> to vector<8x128xi1>
    %341 = arith.andi %339, %340 : vector<8x128xi1>
    %342 = vector.shape_cast %292 : vector<8x1xi32> to vector<8x1xi32>
    %343 = vector.broadcast %342 : vector<8x1xi32> to vector<8x128xi32>
    %344 = arith.select %341, %343, %282 : vector<8x128xi1>, vector<8x128xi32>
    %345 = arith.extui %288 : vector<8x1xi1> to vector<8x1xi32>
    %346 = arith.addi %284, %345 : vector<8x1xi32>
    %c5_i32 = arith.constant 5 : i32
    %cst_85 = arith.constant dense<-2147483648> : vector<8xi32>
    %347 = vector.multi_reduction <maxsi>, %337, %cst_85 [1] : vector<8x128xi32> to vector<8xi32>
    %348 = vector.shape_cast %347 : vector<8xi32> to vector<8x1xi32>
    %349 = vector.broadcast %c-2147483648_i32_13 : i32 to vector<8x1xi32>
    %350 = arith.cmpi sgt, %348, %349 : vector<8x1xi32>
    %c127_i32_86 = arith.constant 127 : i32
    %351 = vector.broadcast %c127_i32_86 : i32 to vector<8x1xi32>
    %352 = arith.andi %348, %351 : vector<8x1xi32>
    %c127_i32_87 = arith.constant 127 : i32
    %353 = vector.broadcast %c127_i32_87 : i32 to vector<8x1xi32>
    %354 = arith.subi %353, %352 : vector<8x1xi32>
    %355 = vector.broadcast %354 : vector<8x1xi32> to vector<8x128xi32>
    %356 = arith.cmpi eq, %12, %355 : vector<8x128xi32>
    %cst_88 = arith.constant 0.000000e+00 : f32
    %357 = vector.broadcast %cst_88 : f32 to vector<8x128xf32>
    %358 = arith.select %356, %2, %357 : vector<8x128xi1>, vector<8x128xf32>
    %cst_89 = arith.constant dense<0.000000e+00> : vector<8xf32>
    %359 = vector.multi_reduction <add>, %358, %cst_89 [1] : vector<8x128xf32> to vector<8xf32>
    %360 = vector.shape_cast %359 : vector<8xf32> to vector<8x1xf32>
    %cst_90 = arith.constant 0.000000e+00 : f32
    %361 = vector.broadcast %cst_90 : f32 to vector<8x128xf32>
    %362 = arith.select %356, %4, %361 : vector<8x128xi1>, vector<8x128xf32>
    %cst_91 = arith.constant dense<0.000000e+00> : vector<8xf32>
    %363 = vector.multi_reduction <add>, %362, %cst_91 [1] : vector<8x128xf32> to vector<8xf32>
    %364 = vector.shape_cast %363 : vector<8xf32> to vector<8x1xf32>
    %cst_92 = arith.constant 0.000000e+00 : f32
    %365 = vector.broadcast %cst_92 : f32 to vector<8x128xf32>
    %366 = arith.select %356, %6, %365 : vector<8x128xi1>, vector<8x128xf32>
    %cst_93 = arith.constant dense<0.000000e+00> : vector<8xf32>
    %367 = vector.multi_reduction <add>, %366, %cst_93 [1] : vector<8x128xf32> to vector<8xf32>
    %368 = vector.shape_cast %367 : vector<8xf32> to vector<8x1xf32>
    %cst_94 = arith.constant 0.000000e+00 : f32
    %369 = vector.broadcast %cst_94 : f32 to vector<8x128xf32>
    %370 = arith.select %356, %8, %369 : vector<8x128xi1>, vector<8x128xf32>
    %cst_95 = arith.constant dense<0.000000e+00> : vector<8xf32>
    %371 = vector.multi_reduction <add>, %370, %cst_95 [1] : vector<8x128xf32> to vector<8xf32>
    %372 = vector.shape_cast %371 : vector<8xf32> to vector<8x1xf32>
    %373 = arith.subf %368, %360 : vector<8x1xf32>
    %374 = arith.subf %372, %364 : vector<8x1xf32>
    %375 = arith.mulf %373, %374 : vector<8x1xf32>
    %376 = vector.broadcast %368 : vector<8x1xf32> to vector<8x128xf32>
    %377 = arith.minimumf %6, %376 : vector<8x128xf32>
    %378 = vector.broadcast %360 : vector<8x1xf32> to vector<8x128xf32>
    %379 = arith.maximumf %2, %378 : vector<8x128xf32>
    %380 = arith.subf %377, %379 : vector<8x128xf32>
    %cst_96 = arith.constant 0.000000e+00 : f32
    %381 = vector.broadcast %cst_96 : f32 to vector<8x128xf32>
    %382 = arith.maximumf %380, %381 : vector<8x128xf32>
    %383 = vector.broadcast %372 : vector<8x1xf32> to vector<8x128xf32>
    %384 = arith.minimumf %8, %383 : vector<8x128xf32>
    %385 = vector.broadcast %364 : vector<8x1xf32> to vector<8x128xf32>
    %386 = arith.maximumf %4, %385 : vector<8x128xf32>
    %387 = arith.subf %384, %386 : vector<8x128xf32>
    %cst_97 = arith.constant 0.000000e+00 : f32
    %388 = vector.broadcast %cst_97 : f32 to vector<8x128xf32>
    %389 = arith.maximumf %387, %388 : vector<8x128xf32>
    %390 = arith.mulf %382, %389 : vector<8x128xf32>
    %391 = vector.broadcast %375 : vector<8x1xf32> to vector<8x128xf32>
    %392 = arith.addf %11, %391 : vector<8x128xf32>
    %393 = arith.subf %392, %390 : vector<8x128xf32>
    %cst_98 = arith.constant 5.000000e-01 : f32
    %394 = vector.broadcast %cst_98 : f32 to vector<8x128xf32>
    %395 = arith.mulf %394, %393 : vector<8x128xf32>
    %396 = arith.cmpf ogt, %390, %395 : vector<8x128xf32>
    %397 = arith.ori %396, %356 : vector<8x128xi1>
    %398 = vector.broadcast %c-2147483648_i32_13 : i32 to vector<8x128xi32>
    %399 = arith.select %397, %398, %337 : vector<8x128xi1>, vector<8x128xi32>
    %400 = vector.broadcast %c5_i32 : i32 to vector<8x128xi32>
    %401 = arith.cmpi eq, %13, %400 : vector<8x128xi32>
    %402 = vector.broadcast %350 : vector<8x1xi1> to vector<8x128xi1>
    %403 = arith.andi %401, %402 : vector<8x128xi1>
    %404 = vector.shape_cast %354 : vector<8x1xi32> to vector<8x1xi32>
    %405 = vector.broadcast %404 : vector<8x1xi32> to vector<8x128xi32>
    %406 = arith.select %403, %405, %344 : vector<8x128xi1>, vector<8x128xi32>
    %407 = arith.extui %350 : vector<8x1xi1> to vector<8x1xi32>
    %408 = arith.addi %346, %407 : vector<8x1xi32>
    %c6_i32 = arith.constant 6 : i32
    %cst_99 = arith.constant dense<-2147483648> : vector<8xi32>
    %409 = vector.multi_reduction <maxsi>, %399, %cst_99 [1] : vector<8x128xi32> to vector<8xi32>
    %410 = vector.shape_cast %409 : vector<8xi32> to vector<8x1xi32>
    %411 = vector.broadcast %c-2147483648_i32_13 : i32 to vector<8x1xi32>
    %412 = arith.cmpi sgt, %410, %411 : vector<8x1xi32>
    %c127_i32_100 = arith.constant 127 : i32
    %413 = vector.broadcast %c127_i32_100 : i32 to vector<8x1xi32>
    %414 = arith.andi %410, %413 : vector<8x1xi32>
    %c127_i32_101 = arith.constant 127 : i32
    %415 = vector.broadcast %c127_i32_101 : i32 to vector<8x1xi32>
    %416 = arith.subi %415, %414 : vector<8x1xi32>
    %417 = vector.broadcast %416 : vector<8x1xi32> to vector<8x128xi32>
    %418 = arith.cmpi eq, %12, %417 : vector<8x128xi32>
    %cst_102 = arith.constant 0.000000e+00 : f32
    %419 = vector.broadcast %cst_102 : f32 to vector<8x128xf32>
    %420 = arith.select %418, %2, %419 : vector<8x128xi1>, vector<8x128xf32>
    %cst_103 = arith.constant dense<0.000000e+00> : vector<8xf32>
    %421 = vector.multi_reduction <add>, %420, %cst_103 [1] : vector<8x128xf32> to vector<8xf32>
    %422 = vector.shape_cast %421 : vector<8xf32> to vector<8x1xf32>
    %cst_104 = arith.constant 0.000000e+00 : f32
    %423 = vector.broadcast %cst_104 : f32 to vector<8x128xf32>
    %424 = arith.select %418, %4, %423 : vector<8x128xi1>, vector<8x128xf32>
    %cst_105 = arith.constant dense<0.000000e+00> : vector<8xf32>
    %425 = vector.multi_reduction <add>, %424, %cst_105 [1] : vector<8x128xf32> to vector<8xf32>
    %426 = vector.shape_cast %425 : vector<8xf32> to vector<8x1xf32>
    %cst_106 = arith.constant 0.000000e+00 : f32
    %427 = vector.broadcast %cst_106 : f32 to vector<8x128xf32>
    %428 = arith.select %418, %6, %427 : vector<8x128xi1>, vector<8x128xf32>
    %cst_107 = arith.constant dense<0.000000e+00> : vector<8xf32>
    %429 = vector.multi_reduction <add>, %428, %cst_107 [1] : vector<8x128xf32> to vector<8xf32>
    %430 = vector.shape_cast %429 : vector<8xf32> to vector<8x1xf32>
    %cst_108 = arith.constant 0.000000e+00 : f32
    %431 = vector.broadcast %cst_108 : f32 to vector<8x128xf32>
    %432 = arith.select %418, %8, %431 : vector<8x128xi1>, vector<8x128xf32>
    %cst_109 = arith.constant dense<0.000000e+00> : vector<8xf32>
    %433 = vector.multi_reduction <add>, %432, %cst_109 [1] : vector<8x128xf32> to vector<8xf32>
    %434 = vector.shape_cast %433 : vector<8xf32> to vector<8x1xf32>
    %435 = arith.subf %430, %422 : vector<8x1xf32>
    %436 = arith.subf %434, %426 : vector<8x1xf32>
    %437 = arith.mulf %435, %436 : vector<8x1xf32>
    %438 = vector.broadcast %430 : vector<8x1xf32> to vector<8x128xf32>
    %439 = arith.minimumf %6, %438 : vector<8x128xf32>
    %440 = vector.broadcast %422 : vector<8x1xf32> to vector<8x128xf32>
    %441 = arith.maximumf %2, %440 : vector<8x128xf32>
    %442 = arith.subf %439, %441 : vector<8x128xf32>
    %cst_110 = arith.constant 0.000000e+00 : f32
    %443 = vector.broadcast %cst_110 : f32 to vector<8x128xf32>
    %444 = arith.maximumf %442, %443 : vector<8x128xf32>
    %445 = vector.broadcast %434 : vector<8x1xf32> to vector<8x128xf32>
    %446 = arith.minimumf %8, %445 : vector<8x128xf32>
    %447 = vector.broadcast %426 : vector<8x1xf32> to vector<8x128xf32>
    %448 = arith.maximumf %4, %447 : vector<8x128xf32>
    %449 = arith.subf %446, %448 : vector<8x128xf32>
    %cst_111 = arith.constant 0.000000e+00 : f32
    %450 = vector.broadcast %cst_111 : f32 to vector<8x128xf32>
    %451 = arith.maximumf %449, %450 : vector<8x128xf32>
    %452 = arith.mulf %444, %451 : vector<8x128xf32>
    %453 = vector.broadcast %437 : vector<8x1xf32> to vector<8x128xf32>
    %454 = arith.addf %11, %453 : vector<8x128xf32>
    %455 = arith.subf %454, %452 : vector<8x128xf32>
    %cst_112 = arith.constant 5.000000e-01 : f32
    %456 = vector.broadcast %cst_112 : f32 to vector<8x128xf32>
    %457 = arith.mulf %456, %455 : vector<8x128xf32>
    %458 = arith.cmpf ogt, %452, %457 : vector<8x128xf32>
    %459 = arith.ori %458, %418 : vector<8x128xi1>
    %460 = vector.broadcast %c-2147483648_i32_13 : i32 to vector<8x128xi32>
    %461 = arith.select %459, %460, %399 : vector<8x128xi1>, vector<8x128xi32>
    %462 = vector.broadcast %c6_i32 : i32 to vector<8x128xi32>
    %463 = arith.cmpi eq, %13, %462 : vector<8x128xi32>
    %464 = vector.broadcast %412 : vector<8x1xi1> to vector<8x128xi1>
    %465 = arith.andi %463, %464 : vector<8x128xi1>
    %466 = vector.shape_cast %416 : vector<8x1xi32> to vector<8x1xi32>
    %467 = vector.broadcast %466 : vector<8x1xi32> to vector<8x128xi32>
    %468 = arith.select %465, %467, %406 : vector<8x128xi1>, vector<8x128xi32>
    %469 = arith.extui %412 : vector<8x1xi1> to vector<8x1xi32>
    %470 = arith.addi %408, %469 : vector<8x1xi32>
    %c7_i32_113 = arith.constant 7 : i32
    %cst_114 = arith.constant dense<-2147483648> : vector<8xi32>
    %471 = vector.multi_reduction <maxsi>, %461, %cst_114 [1] : vector<8x128xi32> to vector<8xi32>
    %472 = vector.shape_cast %471 : vector<8xi32> to vector<8x1xi32>
    %473 = vector.broadcast %c-2147483648_i32_13 : i32 to vector<8x1xi32>
    %474 = arith.cmpi sgt, %472, %473 : vector<8x1xi32>
    %c127_i32_115 = arith.constant 127 : i32
    %475 = vector.broadcast %c127_i32_115 : i32 to vector<8x1xi32>
    %476 = arith.andi %472, %475 : vector<8x1xi32>
    %c127_i32_116 = arith.constant 127 : i32
    %477 = vector.broadcast %c127_i32_116 : i32 to vector<8x1xi32>
    %478 = arith.subi %477, %476 : vector<8x1xi32>
    %479 = vector.broadcast %478 : vector<8x1xi32> to vector<8x128xi32>
    %480 = arith.cmpi eq, %12, %479 : vector<8x128xi32>
    %cst_117 = arith.constant 0.000000e+00 : f32
    %481 = vector.broadcast %cst_117 : f32 to vector<8x128xf32>
    %482 = arith.select %480, %2, %481 : vector<8x128xi1>, vector<8x128xf32>
    %cst_118 = arith.constant dense<0.000000e+00> : vector<8xf32>
    %483 = vector.multi_reduction <add>, %482, %cst_118 [1] : vector<8x128xf32> to vector<8xf32>
    %484 = vector.shape_cast %483 : vector<8xf32> to vector<8x1xf32>
    %cst_119 = arith.constant 0.000000e+00 : f32
    %485 = vector.broadcast %cst_119 : f32 to vector<8x128xf32>
    %486 = arith.select %480, %4, %485 : vector<8x128xi1>, vector<8x128xf32>
    %cst_120 = arith.constant dense<0.000000e+00> : vector<8xf32>
    %487 = vector.multi_reduction <add>, %486, %cst_120 [1] : vector<8x128xf32> to vector<8xf32>
    %488 = vector.shape_cast %487 : vector<8xf32> to vector<8x1xf32>
    %cst_121 = arith.constant 0.000000e+00 : f32
    %489 = vector.broadcast %cst_121 : f32 to vector<8x128xf32>
    %490 = arith.select %480, %6, %489 : vector<8x128xi1>, vector<8x128xf32>
    %cst_122 = arith.constant dense<0.000000e+00> : vector<8xf32>
    %491 = vector.multi_reduction <add>, %490, %cst_122 [1] : vector<8x128xf32> to vector<8xf32>
    %492 = vector.shape_cast %491 : vector<8xf32> to vector<8x1xf32>
    %cst_123 = arith.constant 0.000000e+00 : f32
    %493 = vector.broadcast %cst_123 : f32 to vector<8x128xf32>
    %494 = arith.select %480, %8, %493 : vector<8x128xi1>, vector<8x128xf32>
    %cst_124 = arith.constant dense<0.000000e+00> : vector<8xf32>
    %495 = vector.multi_reduction <add>, %494, %cst_124 [1] : vector<8x128xf32> to vector<8xf32>
    %496 = vector.shape_cast %495 : vector<8xf32> to vector<8x1xf32>
    %497 = arith.subf %492, %484 : vector<8x1xf32>
    %498 = arith.subf %496, %488 : vector<8x1xf32>
    %499 = arith.mulf %497, %498 : vector<8x1xf32>
    %500 = vector.broadcast %492 : vector<8x1xf32> to vector<8x128xf32>
    %501 = arith.minimumf %6, %500 : vector<8x128xf32>
    %502 = vector.broadcast %484 : vector<8x1xf32> to vector<8x128xf32>
    %503 = arith.maximumf %2, %502 : vector<8x128xf32>
    %504 = arith.subf %501, %503 : vector<8x128xf32>
    %cst_125 = arith.constant 0.000000e+00 : f32
    %505 = vector.broadcast %cst_125 : f32 to vector<8x128xf32>
    %506 = arith.maximumf %504, %505 : vector<8x128xf32>
    %507 = vector.broadcast %496 : vector<8x1xf32> to vector<8x128xf32>
    %508 = arith.minimumf %8, %507 : vector<8x128xf32>
    %509 = vector.broadcast %488 : vector<8x1xf32> to vector<8x128xf32>
    %510 = arith.maximumf %4, %509 : vector<8x128xf32>
    %511 = arith.subf %508, %510 : vector<8x128xf32>
    %cst_126 = arith.constant 0.000000e+00 : f32
    %512 = vector.broadcast %cst_126 : f32 to vector<8x128xf32>
    %513 = arith.maximumf %511, %512 : vector<8x128xf32>
    %514 = arith.mulf %506, %513 : vector<8x128xf32>
    %515 = vector.broadcast %499 : vector<8x1xf32> to vector<8x128xf32>
    %516 = arith.addf %11, %515 : vector<8x128xf32>
    %517 = arith.subf %516, %514 : vector<8x128xf32>
    %cst_127 = arith.constant 5.000000e-01 : f32
    %518 = vector.broadcast %cst_127 : f32 to vector<8x128xf32>
    %519 = arith.mulf %518, %517 : vector<8x128xf32>
    %520 = arith.cmpf ogt, %514, %519 : vector<8x128xf32>
    %521 = arith.ori %520, %480 : vector<8x128xi1>
    %522 = vector.broadcast %c-2147483648_i32_13 : i32 to vector<8x128xi32>
    %523 = arith.select %521, %522, %461 : vector<8x128xi1>, vector<8x128xi32>
    %524 = vector.broadcast %c7_i32_113 : i32 to vector<8x128xi32>
    %525 = arith.cmpi eq, %13, %524 : vector<8x128xi32>
    %526 = vector.broadcast %474 : vector<8x1xi1> to vector<8x128xi1>
    %527 = arith.andi %525, %526 : vector<8x128xi1>
    %528 = vector.shape_cast %478 : vector<8x1xi32> to vector<8x1xi32>
    %529 = vector.broadcast %528 : vector<8x1xi32> to vector<8x128xi32>
    %530 = arith.select %527, %529, %468 : vector<8x128xi1>, vector<8x128xi32>
    %531 = arith.extui %474 : vector<8x1xi1> to vector<8x1xi32>
    %532 = arith.addi %470, %531 : vector<8x1xi32>
    %c8_i32 = arith.constant 8 : i32
    %cst_128 = arith.constant dense<-2147483648> : vector<8xi32>
    %533 = vector.multi_reduction <maxsi>, %523, %cst_128 [1] : vector<8x128xi32> to vector<8xi32>
    %534 = vector.shape_cast %533 : vector<8xi32> to vector<8x1xi32>
    %535 = vector.broadcast %c-2147483648_i32_13 : i32 to vector<8x1xi32>
    %536 = arith.cmpi sgt, %534, %535 : vector<8x1xi32>
    %c127_i32_129 = arith.constant 127 : i32
    %537 = vector.broadcast %c127_i32_129 : i32 to vector<8x1xi32>
    %538 = arith.andi %534, %537 : vector<8x1xi32>
    %c127_i32_130 = arith.constant 127 : i32
    %539 = vector.broadcast %c127_i32_130 : i32 to vector<8x1xi32>
    %540 = arith.subi %539, %538 : vector<8x1xi32>
    %541 = vector.broadcast %540 : vector<8x1xi32> to vector<8x128xi32>
    %542 = arith.cmpi eq, %12, %541 : vector<8x128xi32>
    %cst_131 = arith.constant 0.000000e+00 : f32
    %543 = vector.broadcast %cst_131 : f32 to vector<8x128xf32>
    %544 = arith.select %542, %2, %543 : vector<8x128xi1>, vector<8x128xf32>
    %cst_132 = arith.constant dense<0.000000e+00> : vector<8xf32>
    %545 = vector.multi_reduction <add>, %544, %cst_132 [1] : vector<8x128xf32> to vector<8xf32>
    %546 = vector.shape_cast %545 : vector<8xf32> to vector<8x1xf32>
    %cst_133 = arith.constant 0.000000e+00 : f32
    %547 = vector.broadcast %cst_133 : f32 to vector<8x128xf32>
    %548 = arith.select %542, %4, %547 : vector<8x128xi1>, vector<8x128xf32>
    %cst_134 = arith.constant dense<0.000000e+00> : vector<8xf32>
    %549 = vector.multi_reduction <add>, %548, %cst_134 [1] : vector<8x128xf32> to vector<8xf32>
    %550 = vector.shape_cast %549 : vector<8xf32> to vector<8x1xf32>
    %cst_135 = arith.constant 0.000000e+00 : f32
    %551 = vector.broadcast %cst_135 : f32 to vector<8x128xf32>
    %552 = arith.select %542, %6, %551 : vector<8x128xi1>, vector<8x128xf32>
    %cst_136 = arith.constant dense<0.000000e+00> : vector<8xf32>
    %553 = vector.multi_reduction <add>, %552, %cst_136 [1] : vector<8x128xf32> to vector<8xf32>
    %554 = vector.shape_cast %553 : vector<8xf32> to vector<8x1xf32>
    %cst_137 = arith.constant 0.000000e+00 : f32
    %555 = vector.broadcast %cst_137 : f32 to vector<8x128xf32>
    %556 = arith.select %542, %8, %555 : vector<8x128xi1>, vector<8x128xf32>
    %cst_138 = arith.constant dense<0.000000e+00> : vector<8xf32>
    %557 = vector.multi_reduction <add>, %556, %cst_138 [1] : vector<8x128xf32> to vector<8xf32>
    %558 = vector.shape_cast %557 : vector<8xf32> to vector<8x1xf32>
    %559 = arith.subf %554, %546 : vector<8x1xf32>
    %560 = arith.subf %558, %550 : vector<8x1xf32>
    %561 = arith.mulf %559, %560 : vector<8x1xf32>
    %562 = vector.broadcast %554 : vector<8x1xf32> to vector<8x128xf32>
    %563 = arith.minimumf %6, %562 : vector<8x128xf32>
    %564 = vector.broadcast %546 : vector<8x1xf32> to vector<8x128xf32>
    %565 = arith.maximumf %2, %564 : vector<8x128xf32>
    %566 = arith.subf %563, %565 : vector<8x128xf32>
    %cst_139 = arith.constant 0.000000e+00 : f32
    %567 = vector.broadcast %cst_139 : f32 to vector<8x128xf32>
    %568 = arith.maximumf %566, %567 : vector<8x128xf32>
    %569 = vector.broadcast %558 : vector<8x1xf32> to vector<8x128xf32>
    %570 = arith.minimumf %8, %569 : vector<8x128xf32>
    %571 = vector.broadcast %550 : vector<8x1xf32> to vector<8x128xf32>
    %572 = arith.maximumf %4, %571 : vector<8x128xf32>
    %573 = arith.subf %570, %572 : vector<8x128xf32>
    %cst_140 = arith.constant 0.000000e+00 : f32
    %574 = vector.broadcast %cst_140 : f32 to vector<8x128xf32>
    %575 = arith.maximumf %573, %574 : vector<8x128xf32>
    %576 = arith.mulf %568, %575 : vector<8x128xf32>
    %577 = vector.broadcast %561 : vector<8x1xf32> to vector<8x128xf32>
    %578 = arith.addf %11, %577 : vector<8x128xf32>
    %579 = arith.subf %578, %576 : vector<8x128xf32>
    %cst_141 = arith.constant 5.000000e-01 : f32
    %580 = vector.broadcast %cst_141 : f32 to vector<8x128xf32>
    %581 = arith.mulf %580, %579 : vector<8x128xf32>
    %582 = arith.cmpf ogt, %576, %581 : vector<8x128xf32>
    %583 = arith.ori %582, %542 : vector<8x128xi1>
    %584 = vector.broadcast %c-2147483648_i32_13 : i32 to vector<8x128xi32>
    %585 = arith.select %583, %584, %523 : vector<8x128xi1>, vector<8x128xi32>
    %586 = vector.broadcast %c8_i32 : i32 to vector<8x128xi32>
    %587 = arith.cmpi eq, %13, %586 : vector<8x128xi32>
    %588 = vector.broadcast %536 : vector<8x1xi1> to vector<8x128xi1>
    %589 = arith.andi %587, %588 : vector<8x128xi1>
    %590 = vector.shape_cast %540 : vector<8x1xi32> to vector<8x1xi32>
    %591 = vector.broadcast %590 : vector<8x1xi32> to vector<8x128xi32>
    %592 = arith.select %589, %591, %530 : vector<8x128xi1>, vector<8x128xi32>
    %593 = arith.extui %536 : vector<8x1xi1> to vector<8x1xi32>
    %594 = arith.addi %532, %593 : vector<8x1xi32>
    %c9_i32 = arith.constant 9 : i32
    %cst_142 = arith.constant dense<-2147483648> : vector<8xi32>
    %595 = vector.multi_reduction <maxsi>, %585, %cst_142 [1] : vector<8x128xi32> to vector<8xi32>
    %596 = vector.shape_cast %595 : vector<8xi32> to vector<8x1xi32>
    %597 = vector.broadcast %c-2147483648_i32_13 : i32 to vector<8x1xi32>
    %598 = arith.cmpi sgt, %596, %597 : vector<8x1xi32>
    %c127_i32_143 = arith.constant 127 : i32
    %599 = vector.broadcast %c127_i32_143 : i32 to vector<8x1xi32>
    %600 = arith.andi %596, %599 : vector<8x1xi32>
    %c127_i32_144 = arith.constant 127 : i32
    %601 = vector.broadcast %c127_i32_144 : i32 to vector<8x1xi32>
    %602 = arith.subi %601, %600 : vector<8x1xi32>
    %603 = vector.broadcast %602 : vector<8x1xi32> to vector<8x128xi32>
    %604 = arith.cmpi eq, %12, %603 : vector<8x128xi32>
    %cst_145 = arith.constant 0.000000e+00 : f32
    %605 = vector.broadcast %cst_145 : f32 to vector<8x128xf32>
    %606 = arith.select %604, %2, %605 : vector<8x128xi1>, vector<8x128xf32>
    %cst_146 = arith.constant dense<0.000000e+00> : vector<8xf32>
    %607 = vector.multi_reduction <add>, %606, %cst_146 [1] : vector<8x128xf32> to vector<8xf32>
    %608 = vector.shape_cast %607 : vector<8xf32> to vector<8x1xf32>
    %cst_147 = arith.constant 0.000000e+00 : f32
    %609 = vector.broadcast %cst_147 : f32 to vector<8x128xf32>
    %610 = arith.select %604, %4, %609 : vector<8x128xi1>, vector<8x128xf32>
    %cst_148 = arith.constant dense<0.000000e+00> : vector<8xf32>
    %611 = vector.multi_reduction <add>, %610, %cst_148 [1] : vector<8x128xf32> to vector<8xf32>
    %612 = vector.shape_cast %611 : vector<8xf32> to vector<8x1xf32>
    %cst_149 = arith.constant 0.000000e+00 : f32
    %613 = vector.broadcast %cst_149 : f32 to vector<8x128xf32>
    %614 = arith.select %604, %6, %613 : vector<8x128xi1>, vector<8x128xf32>
    %cst_150 = arith.constant dense<0.000000e+00> : vector<8xf32>
    %615 = vector.multi_reduction <add>, %614, %cst_150 [1] : vector<8x128xf32> to vector<8xf32>
    %616 = vector.shape_cast %615 : vector<8xf32> to vector<8x1xf32>
    %cst_151 = arith.constant 0.000000e+00 : f32
    %617 = vector.broadcast %cst_151 : f32 to vector<8x128xf32>
    %618 = arith.select %604, %8, %617 : vector<8x128xi1>, vector<8x128xf32>
    %cst_152 = arith.constant dense<0.000000e+00> : vector<8xf32>
    %619 = vector.multi_reduction <add>, %618, %cst_152 [1] : vector<8x128xf32> to vector<8xf32>
    %620 = vector.shape_cast %619 : vector<8xf32> to vector<8x1xf32>
    %621 = arith.subf %616, %608 : vector<8x1xf32>
    %622 = arith.subf %620, %612 : vector<8x1xf32>
    %623 = arith.mulf %621, %622 : vector<8x1xf32>
    %624 = vector.broadcast %616 : vector<8x1xf32> to vector<8x128xf32>
    %625 = arith.minimumf %6, %624 : vector<8x128xf32>
    %626 = vector.broadcast %608 : vector<8x1xf32> to vector<8x128xf32>
    %627 = arith.maximumf %2, %626 : vector<8x128xf32>
    %628 = arith.subf %625, %627 : vector<8x128xf32>
    %cst_153 = arith.constant 0.000000e+00 : f32
    %629 = vector.broadcast %cst_153 : f32 to vector<8x128xf32>
    %630 = arith.maximumf %628, %629 : vector<8x128xf32>
    %631 = vector.broadcast %620 : vector<8x1xf32> to vector<8x128xf32>
    %632 = arith.minimumf %8, %631 : vector<8x128xf32>
    %633 = vector.broadcast %612 : vector<8x1xf32> to vector<8x128xf32>
    %634 = arith.maximumf %4, %633 : vector<8x128xf32>
    %635 = arith.subf %632, %634 : vector<8x128xf32>
    %cst_154 = arith.constant 0.000000e+00 : f32
    %636 = vector.broadcast %cst_154 : f32 to vector<8x128xf32>
    %637 = arith.maximumf %635, %636 : vector<8x128xf32>
    %638 = arith.mulf %630, %637 : vector<8x128xf32>
    %639 = vector.broadcast %623 : vector<8x1xf32> to vector<8x128xf32>
    %640 = arith.addf %11, %639 : vector<8x128xf32>
    %641 = arith.subf %640, %638 : vector<8x128xf32>
    %cst_155 = arith.constant 5.000000e-01 : f32
    %642 = vector.broadcast %cst_155 : f32 to vector<8x128xf32>
    %643 = arith.mulf %642, %641 : vector<8x128xf32>
    %644 = arith.cmpf ogt, %638, %643 : vector<8x128xf32>
    %645 = arith.ori %644, %604 : vector<8x128xi1>
    %646 = vector.broadcast %c-2147483648_i32_13 : i32 to vector<8x128xi32>
    %647 = arith.select %645, %646, %585 : vector<8x128xi1>, vector<8x128xi32>
    %648 = vector.broadcast %c9_i32 : i32 to vector<8x128xi32>
    %649 = arith.cmpi eq, %13, %648 : vector<8x128xi32>
    %650 = vector.broadcast %598 : vector<8x1xi1> to vector<8x128xi1>
    %651 = arith.andi %649, %650 : vector<8x128xi1>
    %652 = vector.shape_cast %602 : vector<8x1xi32> to vector<8x1xi32>
    %653 = vector.broadcast %652 : vector<8x1xi32> to vector<8x128xi32>
    %654 = arith.select %651, %653, %592 : vector<8x128xi1>, vector<8x128xi32>
    %655 = arith.extui %598 : vector<8x1xi1> to vector<8x1xi32>
    %656 = arith.addi %594, %655 : vector<8x1xi32>
    %c10_i32 = arith.constant 10 : i32
    %cst_156 = arith.constant dense<-2147483648> : vector<8xi32>
    %657 = vector.multi_reduction <maxsi>, %647, %cst_156 [1] : vector<8x128xi32> to vector<8xi32>
    %658 = vector.shape_cast %657 : vector<8xi32> to vector<8x1xi32>
    %659 = vector.broadcast %c-2147483648_i32_13 : i32 to vector<8x1xi32>
    %660 = arith.cmpi sgt, %658, %659 : vector<8x1xi32>
    %c127_i32_157 = arith.constant 127 : i32
    %661 = vector.broadcast %c127_i32_157 : i32 to vector<8x1xi32>
    %662 = arith.andi %658, %661 : vector<8x1xi32>
    %c127_i32_158 = arith.constant 127 : i32
    %663 = vector.broadcast %c127_i32_158 : i32 to vector<8x1xi32>
    %664 = arith.subi %663, %662 : vector<8x1xi32>
    %665 = vector.broadcast %664 : vector<8x1xi32> to vector<8x128xi32>
    %666 = arith.cmpi eq, %12, %665 : vector<8x128xi32>
    %cst_159 = arith.constant 0.000000e+00 : f32
    %667 = vector.broadcast %cst_159 : f32 to vector<8x128xf32>
    %668 = arith.select %666, %2, %667 : vector<8x128xi1>, vector<8x128xf32>
    %cst_160 = arith.constant dense<0.000000e+00> : vector<8xf32>
    %669 = vector.multi_reduction <add>, %668, %cst_160 [1] : vector<8x128xf32> to vector<8xf32>
    %670 = vector.shape_cast %669 : vector<8xf32> to vector<8x1xf32>
    %cst_161 = arith.constant 0.000000e+00 : f32
    %671 = vector.broadcast %cst_161 : f32 to vector<8x128xf32>
    %672 = arith.select %666, %4, %671 : vector<8x128xi1>, vector<8x128xf32>
    %cst_162 = arith.constant dense<0.000000e+00> : vector<8xf32>
    %673 = vector.multi_reduction <add>, %672, %cst_162 [1] : vector<8x128xf32> to vector<8xf32>
    %674 = vector.shape_cast %673 : vector<8xf32> to vector<8x1xf32>
    %cst_163 = arith.constant 0.000000e+00 : f32
    %675 = vector.broadcast %cst_163 : f32 to vector<8x128xf32>
    %676 = arith.select %666, %6, %675 : vector<8x128xi1>, vector<8x128xf32>
    %cst_164 = arith.constant dense<0.000000e+00> : vector<8xf32>
    %677 = vector.multi_reduction <add>, %676, %cst_164 [1] : vector<8x128xf32> to vector<8xf32>
    %678 = vector.shape_cast %677 : vector<8xf32> to vector<8x1xf32>
    %cst_165 = arith.constant 0.000000e+00 : f32
    %679 = vector.broadcast %cst_165 : f32 to vector<8x128xf32>
    %680 = arith.select %666, %8, %679 : vector<8x128xi1>, vector<8x128xf32>
    %cst_166 = arith.constant dense<0.000000e+00> : vector<8xf32>
    %681 = vector.multi_reduction <add>, %680, %cst_166 [1] : vector<8x128xf32> to vector<8xf32>
    %682 = vector.shape_cast %681 : vector<8xf32> to vector<8x1xf32>
    %683 = arith.subf %678, %670 : vector<8x1xf32>
    %684 = arith.subf %682, %674 : vector<8x1xf32>
    %685 = arith.mulf %683, %684 : vector<8x1xf32>
    %686 = vector.broadcast %678 : vector<8x1xf32> to vector<8x128xf32>
    %687 = arith.minimumf %6, %686 : vector<8x128xf32>
    %688 = vector.broadcast %670 : vector<8x1xf32> to vector<8x128xf32>
    %689 = arith.maximumf %2, %688 : vector<8x128xf32>
    %690 = arith.subf %687, %689 : vector<8x128xf32>
    %cst_167 = arith.constant 0.000000e+00 : f32
    %691 = vector.broadcast %cst_167 : f32 to vector<8x128xf32>
    %692 = arith.maximumf %690, %691 : vector<8x128xf32>
    %693 = vector.broadcast %682 : vector<8x1xf32> to vector<8x128xf32>
    %694 = arith.minimumf %8, %693 : vector<8x128xf32>
    %695 = vector.broadcast %674 : vector<8x1xf32> to vector<8x128xf32>
    %696 = arith.maximumf %4, %695 : vector<8x128xf32>
    %697 = arith.subf %694, %696 : vector<8x128xf32>
    %cst_168 = arith.constant 0.000000e+00 : f32
    %698 = vector.broadcast %cst_168 : f32 to vector<8x128xf32>
    %699 = arith.maximumf %697, %698 : vector<8x128xf32>
    %700 = arith.mulf %692, %699 : vector<8x128xf32>
    %701 = vector.broadcast %685 : vector<8x1xf32> to vector<8x128xf32>
    %702 = arith.addf %11, %701 : vector<8x128xf32>
    %703 = arith.subf %702, %700 : vector<8x128xf32>
    %cst_169 = arith.constant 5.000000e-01 : f32
    %704 = vector.broadcast %cst_169 : f32 to vector<8x128xf32>
    %705 = arith.mulf %704, %703 : vector<8x128xf32>
    %706 = arith.cmpf ogt, %700, %705 : vector<8x128xf32>
    %707 = arith.ori %706, %666 : vector<8x128xi1>
    %708 = vector.broadcast %c-2147483648_i32_13 : i32 to vector<8x128xi32>
    %709 = arith.select %707, %708, %647 : vector<8x128xi1>, vector<8x128xi32>
    %710 = vector.broadcast %c10_i32 : i32 to vector<8x128xi32>
    %711 = arith.cmpi eq, %13, %710 : vector<8x128xi32>
    %712 = vector.broadcast %660 : vector<8x1xi1> to vector<8x128xi1>
    %713 = arith.andi %711, %712 : vector<8x128xi1>
    %714 = vector.shape_cast %664 : vector<8x1xi32> to vector<8x1xi32>
    %715 = vector.broadcast %714 : vector<8x1xi32> to vector<8x128xi32>
    %716 = arith.select %713, %715, %654 : vector<8x128xi1>, vector<8x128xi32>
    %717 = arith.extui %660 : vector<8x1xi1> to vector<8x1xi32>
    %718 = arith.addi %656, %717 : vector<8x1xi32>
    %c11_i32 = arith.constant 11 : i32
    %cst_170 = arith.constant dense<-2147483648> : vector<8xi32>
    %719 = vector.multi_reduction <maxsi>, %709, %cst_170 [1] : vector<8x128xi32> to vector<8xi32>
    %720 = vector.shape_cast %719 : vector<8xi32> to vector<8x1xi32>
    %721 = vector.broadcast %c-2147483648_i32_13 : i32 to vector<8x1xi32>
    %722 = arith.cmpi sgt, %720, %721 : vector<8x1xi32>
    %c127_i32_171 = arith.constant 127 : i32
    %723 = vector.broadcast %c127_i32_171 : i32 to vector<8x1xi32>
    %724 = arith.andi %720, %723 : vector<8x1xi32>
    %c127_i32_172 = arith.constant 127 : i32
    %725 = vector.broadcast %c127_i32_172 : i32 to vector<8x1xi32>
    %726 = arith.subi %725, %724 : vector<8x1xi32>
    %727 = vector.broadcast %726 : vector<8x1xi32> to vector<8x128xi32>
    %728 = arith.cmpi eq, %12, %727 : vector<8x128xi32>
    %cst_173 = arith.constant 0.000000e+00 : f32
    %729 = vector.broadcast %cst_173 : f32 to vector<8x128xf32>
    %730 = arith.select %728, %2, %729 : vector<8x128xi1>, vector<8x128xf32>
    %cst_174 = arith.constant dense<0.000000e+00> : vector<8xf32>
    %731 = vector.multi_reduction <add>, %730, %cst_174 [1] : vector<8x128xf32> to vector<8xf32>
    %732 = vector.shape_cast %731 : vector<8xf32> to vector<8x1xf32>
    %cst_175 = arith.constant 0.000000e+00 : f32
    %733 = vector.broadcast %cst_175 : f32 to vector<8x128xf32>
    %734 = arith.select %728, %4, %733 : vector<8x128xi1>, vector<8x128xf32>
    %cst_176 = arith.constant dense<0.000000e+00> : vector<8xf32>
    %735 = vector.multi_reduction <add>, %734, %cst_176 [1] : vector<8x128xf32> to vector<8xf32>
    %736 = vector.shape_cast %735 : vector<8xf32> to vector<8x1xf32>
    %cst_177 = arith.constant 0.000000e+00 : f32
    %737 = vector.broadcast %cst_177 : f32 to vector<8x128xf32>
    %738 = arith.select %728, %6, %737 : vector<8x128xi1>, vector<8x128xf32>
    %cst_178 = arith.constant dense<0.000000e+00> : vector<8xf32>
    %739 = vector.multi_reduction <add>, %738, %cst_178 [1] : vector<8x128xf32> to vector<8xf32>
    %740 = vector.shape_cast %739 : vector<8xf32> to vector<8x1xf32>
    %cst_179 = arith.constant 0.000000e+00 : f32
    %741 = vector.broadcast %cst_179 : f32 to vector<8x128xf32>
    %742 = arith.select %728, %8, %741 : vector<8x128xi1>, vector<8x128xf32>
    %cst_180 = arith.constant dense<0.000000e+00> : vector<8xf32>
    %743 = vector.multi_reduction <add>, %742, %cst_180 [1] : vector<8x128xf32> to vector<8xf32>
    %744 = vector.shape_cast %743 : vector<8xf32> to vector<8x1xf32>
    %745 = arith.subf %740, %732 : vector<8x1xf32>
    %746 = arith.subf %744, %736 : vector<8x1xf32>
    %747 = arith.mulf %745, %746 : vector<8x1xf32>
    %748 = vector.broadcast %740 : vector<8x1xf32> to vector<8x128xf32>
    %749 = arith.minimumf %6, %748 : vector<8x128xf32>
    %750 = vector.broadcast %732 : vector<8x1xf32> to vector<8x128xf32>
    %751 = arith.maximumf %2, %750 : vector<8x128xf32>
    %752 = arith.subf %749, %751 : vector<8x128xf32>
    %cst_181 = arith.constant 0.000000e+00 : f32
    %753 = vector.broadcast %cst_181 : f32 to vector<8x128xf32>
    %754 = arith.maximumf %752, %753 : vector<8x128xf32>
    %755 = vector.broadcast %744 : vector<8x1xf32> to vector<8x128xf32>
    %756 = arith.minimumf %8, %755 : vector<8x128xf32>
    %757 = vector.broadcast %736 : vector<8x1xf32> to vector<8x128xf32>
    %758 = arith.maximumf %4, %757 : vector<8x128xf32>
    %759 = arith.subf %756, %758 : vector<8x128xf32>
    %cst_182 = arith.constant 0.000000e+00 : f32
    %760 = vector.broadcast %cst_182 : f32 to vector<8x128xf32>
    %761 = arith.maximumf %759, %760 : vector<8x128xf32>
    %762 = arith.mulf %754, %761 : vector<8x128xf32>
    %763 = vector.broadcast %747 : vector<8x1xf32> to vector<8x128xf32>
    %764 = arith.addf %11, %763 : vector<8x128xf32>
    %765 = arith.subf %764, %762 : vector<8x128xf32>
    %cst_183 = arith.constant 5.000000e-01 : f32
    %766 = vector.broadcast %cst_183 : f32 to vector<8x128xf32>
    %767 = arith.mulf %766, %765 : vector<8x128xf32>
    %768 = arith.cmpf ogt, %762, %767 : vector<8x128xf32>
    %769 = arith.ori %768, %728 : vector<8x128xi1>
    %770 = vector.broadcast %c-2147483648_i32_13 : i32 to vector<8x128xi32>
    %771 = arith.select %769, %770, %709 : vector<8x128xi1>, vector<8x128xi32>
    %772 = vector.broadcast %c11_i32 : i32 to vector<8x128xi32>
    %773 = arith.cmpi eq, %13, %772 : vector<8x128xi32>
    %774 = vector.broadcast %722 : vector<8x1xi1> to vector<8x128xi1>
    %775 = arith.andi %773, %774 : vector<8x128xi1>
    %776 = vector.shape_cast %726 : vector<8x1xi32> to vector<8x1xi32>
    %777 = vector.broadcast %776 : vector<8x1xi32> to vector<8x128xi32>
    %778 = arith.select %775, %777, %716 : vector<8x128xi1>, vector<8x128xi32>
    %779 = arith.extui %722 : vector<8x1xi1> to vector<8x1xi32>
    %780 = arith.addi %718, %779 : vector<8x1xi32>
    %c12_i32 = arith.constant 12 : i32
    %cst_184 = arith.constant dense<-2147483648> : vector<8xi32>
    %781 = vector.multi_reduction <maxsi>, %771, %cst_184 [1] : vector<8x128xi32> to vector<8xi32>
    %782 = vector.shape_cast %781 : vector<8xi32> to vector<8x1xi32>
    %783 = vector.broadcast %c-2147483648_i32_13 : i32 to vector<8x1xi32>
    %784 = arith.cmpi sgt, %782, %783 : vector<8x1xi32>
    %c127_i32_185 = arith.constant 127 : i32
    %785 = vector.broadcast %c127_i32_185 : i32 to vector<8x1xi32>
    %786 = arith.andi %782, %785 : vector<8x1xi32>
    %c127_i32_186 = arith.constant 127 : i32
    %787 = vector.broadcast %c127_i32_186 : i32 to vector<8x1xi32>
    %788 = arith.subi %787, %786 : vector<8x1xi32>
    %789 = vector.broadcast %788 : vector<8x1xi32> to vector<8x128xi32>
    %790 = arith.cmpi eq, %12, %789 : vector<8x128xi32>
    %cst_187 = arith.constant 0.000000e+00 : f32
    %791 = vector.broadcast %cst_187 : f32 to vector<8x128xf32>
    %792 = arith.select %790, %2, %791 : vector<8x128xi1>, vector<8x128xf32>
    %cst_188 = arith.constant dense<0.000000e+00> : vector<8xf32>
    %793 = vector.multi_reduction <add>, %792, %cst_188 [1] : vector<8x128xf32> to vector<8xf32>
    %794 = vector.shape_cast %793 : vector<8xf32> to vector<8x1xf32>
    %cst_189 = arith.constant 0.000000e+00 : f32
    %795 = vector.broadcast %cst_189 : f32 to vector<8x128xf32>
    %796 = arith.select %790, %4, %795 : vector<8x128xi1>, vector<8x128xf32>
    %cst_190 = arith.constant dense<0.000000e+00> : vector<8xf32>
    %797 = vector.multi_reduction <add>, %796, %cst_190 [1] : vector<8x128xf32> to vector<8xf32>
    %798 = vector.shape_cast %797 : vector<8xf32> to vector<8x1xf32>
    %cst_191 = arith.constant 0.000000e+00 : f32
    %799 = vector.broadcast %cst_191 : f32 to vector<8x128xf32>
    %800 = arith.select %790, %6, %799 : vector<8x128xi1>, vector<8x128xf32>
    %cst_192 = arith.constant dense<0.000000e+00> : vector<8xf32>
    %801 = vector.multi_reduction <add>, %800, %cst_192 [1] : vector<8x128xf32> to vector<8xf32>
    %802 = vector.shape_cast %801 : vector<8xf32> to vector<8x1xf32>
    %cst_193 = arith.constant 0.000000e+00 : f32
    %803 = vector.broadcast %cst_193 : f32 to vector<8x128xf32>
    %804 = arith.select %790, %8, %803 : vector<8x128xi1>, vector<8x128xf32>
    %cst_194 = arith.constant dense<0.000000e+00> : vector<8xf32>
    %805 = vector.multi_reduction <add>, %804, %cst_194 [1] : vector<8x128xf32> to vector<8xf32>
    %806 = vector.shape_cast %805 : vector<8xf32> to vector<8x1xf32>
    %807 = arith.subf %802, %794 : vector<8x1xf32>
    %808 = arith.subf %806, %798 : vector<8x1xf32>
    %809 = arith.mulf %807, %808 : vector<8x1xf32>
    %810 = vector.broadcast %802 : vector<8x1xf32> to vector<8x128xf32>
    %811 = arith.minimumf %6, %810 : vector<8x128xf32>
    %812 = vector.broadcast %794 : vector<8x1xf32> to vector<8x128xf32>
    %813 = arith.maximumf %2, %812 : vector<8x128xf32>
    %814 = arith.subf %811, %813 : vector<8x128xf32>
    %cst_195 = arith.constant 0.000000e+00 : f32
    %815 = vector.broadcast %cst_195 : f32 to vector<8x128xf32>
    %816 = arith.maximumf %814, %815 : vector<8x128xf32>
    %817 = vector.broadcast %806 : vector<8x1xf32> to vector<8x128xf32>
    %818 = arith.minimumf %8, %817 : vector<8x128xf32>
    %819 = vector.broadcast %798 : vector<8x1xf32> to vector<8x128xf32>
    %820 = arith.maximumf %4, %819 : vector<8x128xf32>
    %821 = arith.subf %818, %820 : vector<8x128xf32>
    %cst_196 = arith.constant 0.000000e+00 : f32
    %822 = vector.broadcast %cst_196 : f32 to vector<8x128xf32>
    %823 = arith.maximumf %821, %822 : vector<8x128xf32>
    %824 = arith.mulf %816, %823 : vector<8x128xf32>
    %825 = vector.broadcast %809 : vector<8x1xf32> to vector<8x128xf32>
    %826 = arith.addf %11, %825 : vector<8x128xf32>
    %827 = arith.subf %826, %824 : vector<8x128xf32>
    %cst_197 = arith.constant 5.000000e-01 : f32
    %828 = vector.broadcast %cst_197 : f32 to vector<8x128xf32>
    %829 = arith.mulf %828, %827 : vector<8x128xf32>
    %830 = arith.cmpf ogt, %824, %829 : vector<8x128xf32>
    %831 = arith.ori %830, %790 : vector<8x128xi1>
    %832 = vector.broadcast %c-2147483648_i32_13 : i32 to vector<8x128xi32>
    %833 = arith.select %831, %832, %771 : vector<8x128xi1>, vector<8x128xi32>
    %834 = vector.broadcast %c12_i32 : i32 to vector<8x128xi32>
    %835 = arith.cmpi eq, %13, %834 : vector<8x128xi32>
    %836 = vector.broadcast %784 : vector<8x1xi1> to vector<8x128xi1>
    %837 = arith.andi %835, %836 : vector<8x128xi1>
    %838 = vector.shape_cast %788 : vector<8x1xi32> to vector<8x1xi32>
    %839 = vector.broadcast %838 : vector<8x1xi32> to vector<8x128xi32>
    %840 = arith.select %837, %839, %778 : vector<8x128xi1>, vector<8x128xi32>
    %841 = arith.extui %784 : vector<8x1xi1> to vector<8x1xi32>
    %842 = arith.addi %780, %841 : vector<8x1xi32>
    %c13_i32 = arith.constant 13 : i32
    %cst_198 = arith.constant dense<-2147483648> : vector<8xi32>
    %843 = vector.multi_reduction <maxsi>, %833, %cst_198 [1] : vector<8x128xi32> to vector<8xi32>
    %844 = vector.shape_cast %843 : vector<8xi32> to vector<8x1xi32>
    %845 = vector.broadcast %c-2147483648_i32_13 : i32 to vector<8x1xi32>
    %846 = arith.cmpi sgt, %844, %845 : vector<8x1xi32>
    %c127_i32_199 = arith.constant 127 : i32
    %847 = vector.broadcast %c127_i32_199 : i32 to vector<8x1xi32>
    %848 = arith.andi %844, %847 : vector<8x1xi32>
    %c127_i32_200 = arith.constant 127 : i32
    %849 = vector.broadcast %c127_i32_200 : i32 to vector<8x1xi32>
    %850 = arith.subi %849, %848 : vector<8x1xi32>
    %851 = vector.broadcast %850 : vector<8x1xi32> to vector<8x128xi32>
    %852 = arith.cmpi eq, %12, %851 : vector<8x128xi32>
    %cst_201 = arith.constant 0.000000e+00 : f32
    %853 = vector.broadcast %cst_201 : f32 to vector<8x128xf32>
    %854 = arith.select %852, %2, %853 : vector<8x128xi1>, vector<8x128xf32>
    %cst_202 = arith.constant dense<0.000000e+00> : vector<8xf32>
    %855 = vector.multi_reduction <add>, %854, %cst_202 [1] : vector<8x128xf32> to vector<8xf32>
    %856 = vector.shape_cast %855 : vector<8xf32> to vector<8x1xf32>
    %cst_203 = arith.constant 0.000000e+00 : f32
    %857 = vector.broadcast %cst_203 : f32 to vector<8x128xf32>
    %858 = arith.select %852, %4, %857 : vector<8x128xi1>, vector<8x128xf32>
    %cst_204 = arith.constant dense<0.000000e+00> : vector<8xf32>
    %859 = vector.multi_reduction <add>, %858, %cst_204 [1] : vector<8x128xf32> to vector<8xf32>
    %860 = vector.shape_cast %859 : vector<8xf32> to vector<8x1xf32>
    %cst_205 = arith.constant 0.000000e+00 : f32
    %861 = vector.broadcast %cst_205 : f32 to vector<8x128xf32>
    %862 = arith.select %852, %6, %861 : vector<8x128xi1>, vector<8x128xf32>
    %cst_206 = arith.constant dense<0.000000e+00> : vector<8xf32>
    %863 = vector.multi_reduction <add>, %862, %cst_206 [1] : vector<8x128xf32> to vector<8xf32>
    %864 = vector.shape_cast %863 : vector<8xf32> to vector<8x1xf32>
    %cst_207 = arith.constant 0.000000e+00 : f32
    %865 = vector.broadcast %cst_207 : f32 to vector<8x128xf32>
    %866 = arith.select %852, %8, %865 : vector<8x128xi1>, vector<8x128xf32>
    %cst_208 = arith.constant dense<0.000000e+00> : vector<8xf32>
    %867 = vector.multi_reduction <add>, %866, %cst_208 [1] : vector<8x128xf32> to vector<8xf32>
    %868 = vector.shape_cast %867 : vector<8xf32> to vector<8x1xf32>
    %869 = arith.subf %864, %856 : vector<8x1xf32>
    %870 = arith.subf %868, %860 : vector<8x1xf32>
    %871 = arith.mulf %869, %870 : vector<8x1xf32>
    %872 = vector.broadcast %864 : vector<8x1xf32> to vector<8x128xf32>
    %873 = arith.minimumf %6, %872 : vector<8x128xf32>
    %874 = vector.broadcast %856 : vector<8x1xf32> to vector<8x128xf32>
    %875 = arith.maximumf %2, %874 : vector<8x128xf32>
    %876 = arith.subf %873, %875 : vector<8x128xf32>
    %cst_209 = arith.constant 0.000000e+00 : f32
    %877 = vector.broadcast %cst_209 : f32 to vector<8x128xf32>
    %878 = arith.maximumf %876, %877 : vector<8x128xf32>
    %879 = vector.broadcast %868 : vector<8x1xf32> to vector<8x128xf32>
    %880 = arith.minimumf %8, %879 : vector<8x128xf32>
    %881 = vector.broadcast %860 : vector<8x1xf32> to vector<8x128xf32>
    %882 = arith.maximumf %4, %881 : vector<8x128xf32>
    %883 = arith.subf %880, %882 : vector<8x128xf32>
    %cst_210 = arith.constant 0.000000e+00 : f32
    %884 = vector.broadcast %cst_210 : f32 to vector<8x128xf32>
    %885 = arith.maximumf %883, %884 : vector<8x128xf32>
    %886 = arith.mulf %878, %885 : vector<8x128xf32>
    %887 = vector.broadcast %871 : vector<8x1xf32> to vector<8x128xf32>
    %888 = arith.addf %11, %887 : vector<8x128xf32>
    %889 = arith.subf %888, %886 : vector<8x128xf32>
    %cst_211 = arith.constant 5.000000e-01 : f32
    %890 = vector.broadcast %cst_211 : f32 to vector<8x128xf32>
    %891 = arith.mulf %890, %889 : vector<8x128xf32>
    %892 = arith.cmpf ogt, %886, %891 : vector<8x128xf32>
    %893 = arith.ori %892, %852 : vector<8x128xi1>
    %894 = vector.broadcast %c-2147483648_i32_13 : i32 to vector<8x128xi32>
    %895 = arith.select %893, %894, %833 : vector<8x128xi1>, vector<8x128xi32>
    %896 = vector.broadcast %c13_i32 : i32 to vector<8x128xi32>
    %897 = arith.cmpi eq, %13, %896 : vector<8x128xi32>
    %898 = vector.broadcast %846 : vector<8x1xi1> to vector<8x128xi1>
    %899 = arith.andi %897, %898 : vector<8x128xi1>
    %900 = vector.shape_cast %850 : vector<8x1xi32> to vector<8x1xi32>
    %901 = vector.broadcast %900 : vector<8x1xi32> to vector<8x128xi32>
    %902 = arith.select %899, %901, %840 : vector<8x128xi1>, vector<8x128xi32>
    %903 = arith.extui %846 : vector<8x1xi1> to vector<8x1xi32>
    %904 = arith.addi %842, %903 : vector<8x1xi32>
    %c14_i32 = arith.constant 14 : i32
    %cst_212 = arith.constant dense<-2147483648> : vector<8xi32>
    %905 = vector.multi_reduction <maxsi>, %895, %cst_212 [1] : vector<8x128xi32> to vector<8xi32>
    %906 = vector.shape_cast %905 : vector<8xi32> to vector<8x1xi32>
    %907 = vector.broadcast %c-2147483648_i32_13 : i32 to vector<8x1xi32>
    %908 = arith.cmpi sgt, %906, %907 : vector<8x1xi32>
    %c127_i32_213 = arith.constant 127 : i32
    %909 = vector.broadcast %c127_i32_213 : i32 to vector<8x1xi32>
    %910 = arith.andi %906, %909 : vector<8x1xi32>
    %c127_i32_214 = arith.constant 127 : i32
    %911 = vector.broadcast %c127_i32_214 : i32 to vector<8x1xi32>
    %912 = arith.subi %911, %910 : vector<8x1xi32>
    %913 = vector.broadcast %912 : vector<8x1xi32> to vector<8x128xi32>
    %914 = arith.cmpi eq, %12, %913 : vector<8x128xi32>
    %cst_215 = arith.constant 0.000000e+00 : f32
    %915 = vector.broadcast %cst_215 : f32 to vector<8x128xf32>
    %916 = arith.select %914, %2, %915 : vector<8x128xi1>, vector<8x128xf32>
    %cst_216 = arith.constant dense<0.000000e+00> : vector<8xf32>
    %917 = vector.multi_reduction <add>, %916, %cst_216 [1] : vector<8x128xf32> to vector<8xf32>
    %918 = vector.shape_cast %917 : vector<8xf32> to vector<8x1xf32>
    %cst_217 = arith.constant 0.000000e+00 : f32
    %919 = vector.broadcast %cst_217 : f32 to vector<8x128xf32>
    %920 = arith.select %914, %4, %919 : vector<8x128xi1>, vector<8x128xf32>
    %cst_218 = arith.constant dense<0.000000e+00> : vector<8xf32>
    %921 = vector.multi_reduction <add>, %920, %cst_218 [1] : vector<8x128xf32> to vector<8xf32>
    %922 = vector.shape_cast %921 : vector<8xf32> to vector<8x1xf32>
    %cst_219 = arith.constant 0.000000e+00 : f32
    %923 = vector.broadcast %cst_219 : f32 to vector<8x128xf32>
    %924 = arith.select %914, %6, %923 : vector<8x128xi1>, vector<8x128xf32>
    %cst_220 = arith.constant dense<0.000000e+00> : vector<8xf32>
    %925 = vector.multi_reduction <add>, %924, %cst_220 [1] : vector<8x128xf32> to vector<8xf32>
    %926 = vector.shape_cast %925 : vector<8xf32> to vector<8x1xf32>
    %cst_221 = arith.constant 0.000000e+00 : f32
    %927 = vector.broadcast %cst_221 : f32 to vector<8x128xf32>
    %928 = arith.select %914, %8, %927 : vector<8x128xi1>, vector<8x128xf32>
    %cst_222 = arith.constant dense<0.000000e+00> : vector<8xf32>
    %929 = vector.multi_reduction <add>, %928, %cst_222 [1] : vector<8x128xf32> to vector<8xf32>
    %930 = vector.shape_cast %929 : vector<8xf32> to vector<8x1xf32>
    %931 = arith.subf %926, %918 : vector<8x1xf32>
    %932 = arith.subf %930, %922 : vector<8x1xf32>
    %933 = arith.mulf %931, %932 : vector<8x1xf32>
    %934 = vector.broadcast %926 : vector<8x1xf32> to vector<8x128xf32>
    %935 = arith.minimumf %6, %934 : vector<8x128xf32>
    %936 = vector.broadcast %918 : vector<8x1xf32> to vector<8x128xf32>
    %937 = arith.maximumf %2, %936 : vector<8x128xf32>
    %938 = arith.subf %935, %937 : vector<8x128xf32>
    %cst_223 = arith.constant 0.000000e+00 : f32
    %939 = vector.broadcast %cst_223 : f32 to vector<8x128xf32>
    %940 = arith.maximumf %938, %939 : vector<8x128xf32>
    %941 = vector.broadcast %930 : vector<8x1xf32> to vector<8x128xf32>
    %942 = arith.minimumf %8, %941 : vector<8x128xf32>
    %943 = vector.broadcast %922 : vector<8x1xf32> to vector<8x128xf32>
    %944 = arith.maximumf %4, %943 : vector<8x128xf32>
    %945 = arith.subf %942, %944 : vector<8x128xf32>
    %cst_224 = arith.constant 0.000000e+00 : f32
    %946 = vector.broadcast %cst_224 : f32 to vector<8x128xf32>
    %947 = arith.maximumf %945, %946 : vector<8x128xf32>
    %948 = arith.mulf %940, %947 : vector<8x128xf32>
    %949 = vector.broadcast %933 : vector<8x1xf32> to vector<8x128xf32>
    %950 = arith.addf %11, %949 : vector<8x128xf32>
    %951 = arith.subf %950, %948 : vector<8x128xf32>
    %cst_225 = arith.constant 5.000000e-01 : f32
    %952 = vector.broadcast %cst_225 : f32 to vector<8x128xf32>
    %953 = arith.mulf %952, %951 : vector<8x128xf32>
    %954 = arith.cmpf ogt, %948, %953 : vector<8x128xf32>
    %955 = arith.ori %954, %914 : vector<8x128xi1>
    %956 = vector.broadcast %c-2147483648_i32_13 : i32 to vector<8x128xi32>
    %957 = arith.select %955, %956, %895 : vector<8x128xi1>, vector<8x128xi32>
    %958 = vector.broadcast %c14_i32 : i32 to vector<8x128xi32>
    %959 = arith.cmpi eq, %13, %958 : vector<8x128xi32>
    %960 = vector.broadcast %908 : vector<8x1xi1> to vector<8x128xi1>
    %961 = arith.andi %959, %960 : vector<8x128xi1>
    %962 = vector.shape_cast %912 : vector<8x1xi32> to vector<8x1xi32>
    %963 = vector.broadcast %962 : vector<8x1xi32> to vector<8x128xi32>
    %964 = arith.select %961, %963, %902 : vector<8x128xi1>, vector<8x128xi32>
    %965 = arith.extui %908 : vector<8x1xi1> to vector<8x1xi32>
    %966 = arith.addi %904, %965 : vector<8x1xi32>
    %c15_i32 = arith.constant 15 : i32
    %cst_226 = arith.constant dense<-2147483648> : vector<8xi32>
    %967 = vector.multi_reduction <maxsi>, %957, %cst_226 [1] : vector<8x128xi32> to vector<8xi32>
    %968 = vector.shape_cast %967 : vector<8xi32> to vector<8x1xi32>
    %969 = vector.broadcast %c-2147483648_i32_13 : i32 to vector<8x1xi32>
    %970 = arith.cmpi sgt, %968, %969 : vector<8x1xi32>
    %c127_i32_227 = arith.constant 127 : i32
    %971 = vector.broadcast %c127_i32_227 : i32 to vector<8x1xi32>
    %972 = arith.andi %968, %971 : vector<8x1xi32>
    %c127_i32_228 = arith.constant 127 : i32
    %973 = vector.broadcast %c127_i32_228 : i32 to vector<8x1xi32>
    %974 = arith.subi %973, %972 : vector<8x1xi32>
    %975 = vector.broadcast %974 : vector<8x1xi32> to vector<8x128xi32>
    %976 = arith.cmpi eq, %12, %975 : vector<8x128xi32>
    %cst_229 = arith.constant 0.000000e+00 : f32
    %977 = vector.broadcast %cst_229 : f32 to vector<8x128xf32>
    %978 = arith.select %976, %2, %977 : vector<8x128xi1>, vector<8x128xf32>
    %cst_230 = arith.constant dense<0.000000e+00> : vector<8xf32>
    %979 = vector.multi_reduction <add>, %978, %cst_230 [1] : vector<8x128xf32> to vector<8xf32>
    %980 = vector.shape_cast %979 : vector<8xf32> to vector<8x1xf32>
    %cst_231 = arith.constant 0.000000e+00 : f32
    %981 = vector.broadcast %cst_231 : f32 to vector<8x128xf32>
    %982 = arith.select %976, %4, %981 : vector<8x128xi1>, vector<8x128xf32>
    %cst_232 = arith.constant dense<0.000000e+00> : vector<8xf32>
    %983 = vector.multi_reduction <add>, %982, %cst_232 [1] : vector<8x128xf32> to vector<8xf32>
    %984 = vector.shape_cast %983 : vector<8xf32> to vector<8x1xf32>
    %cst_233 = arith.constant 0.000000e+00 : f32
    %985 = vector.broadcast %cst_233 : f32 to vector<8x128xf32>
    %986 = arith.select %976, %6, %985 : vector<8x128xi1>, vector<8x128xf32>
    %cst_234 = arith.constant dense<0.000000e+00> : vector<8xf32>
    %987 = vector.multi_reduction <add>, %986, %cst_234 [1] : vector<8x128xf32> to vector<8xf32>
    %988 = vector.shape_cast %987 : vector<8xf32> to vector<8x1xf32>
    %cst_235 = arith.constant 0.000000e+00 : f32
    %989 = vector.broadcast %cst_235 : f32 to vector<8x128xf32>
    %990 = arith.select %976, %8, %989 : vector<8x128xi1>, vector<8x128xf32>
    %cst_236 = arith.constant dense<0.000000e+00> : vector<8xf32>
    %991 = vector.multi_reduction <add>, %990, %cst_236 [1] : vector<8x128xf32> to vector<8xf32>
    %992 = vector.shape_cast %991 : vector<8xf32> to vector<8x1xf32>
    %993 = arith.subf %988, %980 : vector<8x1xf32>
    %994 = arith.subf %992, %984 : vector<8x1xf32>
    %995 = arith.mulf %993, %994 : vector<8x1xf32>
    %996 = vector.broadcast %988 : vector<8x1xf32> to vector<8x128xf32>
    %997 = arith.minimumf %6, %996 : vector<8x128xf32>
    %998 = vector.broadcast %980 : vector<8x1xf32> to vector<8x128xf32>
    %999 = arith.maximumf %2, %998 : vector<8x128xf32>
    %1000 = arith.subf %997, %999 : vector<8x128xf32>
    %cst_237 = arith.constant 0.000000e+00 : f32
    %1001 = vector.broadcast %cst_237 : f32 to vector<8x128xf32>
    %1002 = arith.maximumf %1000, %1001 : vector<8x128xf32>
    %1003 = vector.broadcast %992 : vector<8x1xf32> to vector<8x128xf32>
    %1004 = arith.minimumf %8, %1003 : vector<8x128xf32>
    %1005 = vector.broadcast %984 : vector<8x1xf32> to vector<8x128xf32>
    %1006 = arith.maximumf %4, %1005 : vector<8x128xf32>
    %1007 = arith.subf %1004, %1006 : vector<8x128xf32>
    %cst_238 = arith.constant 0.000000e+00 : f32
    %1008 = vector.broadcast %cst_238 : f32 to vector<8x128xf32>
    %1009 = arith.maximumf %1007, %1008 : vector<8x128xf32>
    %1010 = arith.mulf %1002, %1009 : vector<8x128xf32>
    %1011 = vector.broadcast %995 : vector<8x1xf32> to vector<8x128xf32>
    %1012 = arith.addf %11, %1011 : vector<8x128xf32>
    %1013 = arith.subf %1012, %1010 : vector<8x128xf32>
    %cst_239 = arith.constant 5.000000e-01 : f32
    %1014 = vector.broadcast %cst_239 : f32 to vector<8x128xf32>
    %1015 = arith.mulf %1014, %1013 : vector<8x128xf32>
    %1016 = arith.cmpf ogt, %1010, %1015 : vector<8x128xf32>
    %1017 = arith.ori %1016, %976 : vector<8x128xi1>
    %1018 = vector.broadcast %c-2147483648_i32_13 : i32 to vector<8x128xi32>
    %1019 = arith.select %1017, %1018, %957 : vector<8x128xi1>, vector<8x128xi32>
    %1020 = vector.broadcast %c15_i32 : i32 to vector<8x128xi32>
    %1021 = arith.cmpi eq, %13, %1020 : vector<8x128xi32>
    %1022 = vector.broadcast %970 : vector<8x1xi1> to vector<8x128xi1>
    %1023 = arith.andi %1021, %1022 : vector<8x128xi1>
    %1024 = vector.shape_cast %974 : vector<8x1xi32> to vector<8x1xi32>
    %1025 = vector.broadcast %1024 : vector<8x1xi32> to vector<8x128xi32>
    %1026 = arith.select %1023, %1025, %964 : vector<8x128xi1>, vector<8x128xi32>
    %1027 = arith.extui %970 : vector<8x1xi1> to vector<8x1xi32>
    %1028 = arith.addi %966, %1027 : vector<8x1xi32>
    %c16_i32_240 = arith.constant 16 : i32
    %c16_i32_241 = arith.constant 16 : i32
    %1029 = vector.broadcast %c16_i32_241 : i32 to vector<8x128xi32>
    %1030 = arith.cmpi eq, %13, %1029 : vector<8x128xi32>
    %1031 = vector.shape_cast %1028 : vector<8x1xi32> to vector<8x1xi32>
    %1032 = vector.broadcast %1031 : vector<8x1xi32> to vector<8x128xi32>
    %1033 = arith.select %1030, %1032, %1026 : vector<8x128xi1>, vector<8x128xi32>
    %c0_242 = arith.constant 0 : index
    %c0_243 = arith.constant 0 : index
    %1034 = vector.load %arg3[%c0_242, %c0_243] : memref<8x128xi32, #tpu.memory_space<vmem>>, vector<8x128xi32>
    tpu.vector_store %arg3[%c0_242, %c0_243], %1033 {strides = array<i32>} : memref<8x128xi32, #tpu.memory_space<vmem>>, vector<8x128xi32>,
    return
  }
  func.func @transform_0(%arg0: i32) -> (i32, i32) {
    %c0_i32 = arith.constant 0 : i32
    %c0_i32_0 = arith.constant 0 : i32
    return %arg0, %c0_i32 : i32, i32
  }
  func.func @transform_1(%arg0: i32) -> (i32, i32, i32) {
    %c0_i32 = arith.constant 0 : i32
    %c0_i32_0 = arith.constant 0 : i32
    %c0_i32_1 = arith.constant 0 : i32
    return %c0_i32, %arg0, %c0_i32_0 : i32, i32, i32
  }
  func.func @transform_2(%arg0: i32) -> (i32, i32) {
    %c0_i32 = arith.constant 0 : i32
    %c0_i32_0 = arith.constant 0 : i32
    return %arg0, %c0_i32 : i32, i32
  }
}

</mosaic_0001>

<llo_original>
// kernel: tpu_custom_call.1
$region0: #{tpu_custom_call.1}
  #allocation0 [shape = 'u32[]', space=smem, size = 0x4, offset = 0x4, fixed_abs, tag = 'smem constant byte address 0x4 - core index']
  #allocation1 [shape = 'u32[144,128]{1,0:T(1,128)}', space=vmem, size = 0x12000, scoped, tag = 'internal scratch']
  %s0 = inlined_call_operand.hbm [shape: f32[8,128], index: 0, kind: input, shape index: {}]
  %s1 = inlined_call_operand.hbm [shape: f32[4,8,128], index: 1, kind: input, shape index: {}]
  %s2 = inlined_call_operand.hbm [shape: s32[8,128], index: 2, kind: output, shape index: {}]
  %s3 = sld [smem:[#allocation0]]
  $region26: #{tpu_custom_call.1} parent=0
    _
  %s5 = ssub.s32 1, %s3
  %s6 = scalar_select 0, %s5, %s3
  $region1: #{tpu_custom_call.1} parent=0
    #allocation2 [shape = 'u8[4096]{0}', space=vmem, size = 0x1000, scoped, tag = 'input window, operand 0, single buffered']
    #allocation3 [shape = 's32[1]{0}', space=sflag, size = 0x4, scoped, tag = 'scoped memory for tpu_custom_call.1']
    #allocation4 [shape = 's32[1]{0}', space=sflag, size = 0x4, scoped, tag = 'scoped memory for tpu_custom_call.1']
    #allocation5 [shape = 'u8[16384]{0}', space=vmem, size = 0x4000, scoped, tag = 'input window, operand 1, single buffered']
    #allocation6 [shape = 's32[1]{0}', space=sflag, size = 0x4, scoped, tag = 'scoped memory for tpu_custom_call.1']
    #allocation7 [shape = 'u8[4096]{0}', space=vmem, size = 0x1000, scoped, tag = 'output window, operand 0, single buffered']
    %7 = vsyncpa [#allocation3], 0
    %8 = vsyncpa [#allocation6], 0
    %9 = vsyncpa [#allocation4], 0
    // Predicated region
    $region2: #{tpu_custom_call.1} parent=1 // pred_check
      _
    $region3: #{tpu_custom_call.1} parent=1 // pred_check_branch
      %11 = sbr.rel (0) target = $region5
    $region4: #{tpu_custom_call.1} parent=1 // pred_region
      %s13 = ssub.s32 128, 128
      %14 = vsyncadd [#allocation3], %s13
      %s16 = sshll.u32 [#allocation2], 4
      %s17 = int_to_ptr.vmem [resolvable:$true] %s16
      %19 = dma.hbm_to_vmem [thread:$0]  %s0, 128, %s17, [#allocation3]
    $region5: #{tpu_custom_call.1} parent=1 // pred_fallthru
      _
    // Predicated region
    $region6: #{tpu_custom_call.1} parent=1 // pred_check
      _
    $region7: #{tpu_custom_call.1} parent=1 // pred_check_branch
      %21 = sbr.rel (0) target = $region9
    $region8: #{tpu_custom_call.1} parent=1 // pred_region
      %s23 = ssub.s32 512, 512
      %24 = vsyncadd [#allocation6], %s23
      %s25 = sshll.u32 [#allocation5], 4
      %s26 = int_to_ptr.vmem [resolvable:$true] %s25
      %31 = dma.hbm_to_vmem [thread:$0]  %s1, 512, %s26, [#allocation6], 128, 128, 8
    $region9: #{tpu_custom_call.1} parent=1 // pred_fallthru
      _
    // Predicated region
    $region10: #{tpu_custom_call.1} parent=1 // pred_check
      _
    $region11: #{tpu_custom_call.1} parent=1 // pred_check_branch
      %33 = sbr.rel (0) target = $region13
    $region12: #{tpu_custom_call.1} parent=1 // pred_region
      %34 = dma.done [#allocation3], 128
    $region13: #{tpu_custom_call.1} parent=1 // pred_fallthru
      _
    // Predicated region
    $region14: #{tpu_custom_call.1} parent=1 // pred_check
      _
    $region15: #{tpu_custom_call.1} parent=1 // pred_check_branch
      %36 = sbr.rel (0) target = $region17
    $region16: #{tpu_custom_call.1} parent=1 // pred_region
      %37 = dma.done [#allocation6], 512
    $region17: #{tpu_custom_call.1} parent=1 // pred_fallthru
      _
    %v38 = vld [vmem:[#allocation2] sm:$0xff]
    %v39 = vld [vmem:[#allocation5] sm:$0xff]
    %s40 = scalar_lea.vmem [#allocation5], 8
    %v41 = vld [vmem:[%s40] sm:$0xff]
    %s42 = scalar_lea.vmem [#allocation5], 16
    %v43 = vld [vmem:[%s42] sm:$0xff]
    %s44 = scalar_lea.vmem [#allocation5], 24
    %v45 = vld [vmem:[%s44] sm:$0xff]
    %v46 = vsub.f32 %v43, %v39
    %v47 = vsub.f32 %v45, %v41
    %v48 = vmul.f32 %v46, %v47
    %v49 = vlaneseq
    %v50 = vand.u32 %v49, 127
    %vm52 = vcmp.lt.s32.totalorder %v38, 0
    %v53 = vxor.u32 %v38, 2147483647
    %v54 = vsel %vm52, %v53, %v38
    %v55 = vsub.s32 127, %v50
    %v56 = vshra.s32 %v54, 7
    %v57 = vshll.u32 %v56, 7
    %v58 = vor.u32 %v57, %v55
    %vm59 = vcmp.gt.f32.partialorder %v38, 0.3
    %v60 = vsel %vm59, %v58, 2147483648
    %vm61 = vcmp.lt.s32.totalorder %v50, 16
    %v62 = vsel %vm61, 4294967295, 0
    %v63 = vand.u32 %v60, 65535
    %v64 = vshra.s32 %v60, 16
    %v65 = vcvt.s32.f32 %v63
    %v66 = vcvt.s32.f32 %v64
    %67 = vmax.xlane.f32.xlu0 %v66
    %v68 = vpop.xlane.xlu0 %67
    %vm69 = vcmp.eq.f32.partialorder %v66, %v68
    %v70 = vsel %vm69, %v65, -inf
    %71 = vmax.xlane.f32.xlu0 %v70
    %v72 = vpop.xlane.xlu0 %71
    %v73 = vcvt.f32.s32 %v72
    %v74 = vcvt.f32.s32 %v68
    %v75 = vshll.u32 %v74, 16
    %v76 = vadd.s32 %v75, %v73
    %vm77 = vcmp.gt.s32.totalorder %v76, 2147483648
    %v78 = vand.u32 %v76, 127
    %v79 = vsub.s32 127, %v78
    %vm80 = vcmp.eq.s32.totalorder %v50, %v79
    %v81 = vsel %vm80, %v39, 0.0
    %82 = vadd.xlane.f32.xlu0 %v81
    %v83 = vpop.xlane.xlu0 %82
    %v84 = vsel %vm80, %v41, 0.0
    %85 = vadd.xlane.f32.xlu0 %v84
    %v86 = vpop.xlane.xlu0 %85
    %v87 = vsel %vm80, %v43, 0.0
    %88 = vadd.xlane.f32.xlu0 %v87
    %v89 = vpop.xlane.xlu0 %88
    %v90 = vsel %vm80, %v45, 0.0
    %91 = vadd.xlane.f32.xlu0 %v90
    %v92 = vpop.xlane.xlu0 %91
    %v93 = vsub.f32 %v89, %v83
    %v94 = vsub.f32 %v92, %v86
    %v95 = vmul.f32 %v93, %v94
    %v96 = vmin.f32 %v43, %v89
    %v97 = vmax.f32 %v39, %v83
    %v98 = vsub.f32 %v96, %v97
    %v99 = vmax.f32 %v98, 0.0
    %v100 = vmin.f32 %v45, %v92
    %v101 = vmax.f32 %v41, %v86
    %v102 = vsub.f32 %v100, %v101
    %v103 = vmax.f32 %v102, 0.0
    %v104 = vmul.f32 %v99, %v103
    %v105 = vadd.f32 %v48, %v95
    %v106 = vsub.f32 %v105, %v104
    %v107 = vmul.f32 %v106, 0.5
    %vm108 = vcmp.gt.f32.partialorder %v104, %v107
    %vm109 = vmor %vm108, %vm80
    %v110 = vsel %vm109, 2147483648, %v60
    %vm111 = vcmp.eq.s32.totalorder %v50, 0
    %v112 = vsel %vm77, 1, 0
    %vm113 = vcmp.eq.s32.totalorder %v112, 1
    %vm114 = vmand %vm111, %vm113
    %v115 = vsel %vm114, %v79, %v62
    %v116 = vand.u32 %v110, 65535
    %v117 = vshra.s32 %v110, 16
    %v118 = vcvt.s32.f32 %v116
    %v119 = vcvt.s32.f32 %v117
    %120 = vmax.xlane.f32.xlu0 %v119
    %v121 = vpop.xlane.xlu0 %120
    %vm122 = vcmp.eq.f32.partialorder %v119, %v121
    %v123 = vsel %vm122, %v118, -inf
    %124 = vmax.xlane.f32.xlu0 %v123
    %v125 = vpop.xlane.xlu0 %124
    %v126 = vcvt.f32.s32 %v125
    %v127 = vcvt.f32.s32 %v121
    %v128 = vshll.u32 %v127, 16
    %v129 = vadd.s32 %v128, %v126
    %vm130 = vcmp.gt.s32.totalorder %v129, 2147483648
    %v131 = vand.u32 %v129, 127
    %v132 = vsub.s32 127, %v131
    %vm133 = vcmp.eq.s32.totalorder %v50, %v132
    %v134 = vsel %vm133, %v39, 0.0
    %135 = vadd.xlane.f32.xlu0 %v134
    %v136 = vpop.xlane.xlu0 %135
    %v137 = vsel %vm133, %v41, 0.0
    %138 = vadd.xlane.f32.xlu0 %v137
    %v139 = vpop.xlane.xlu0 %138
    %v140 = vsel %vm133, %v43, 0.0
    %141 = vadd.xlane.f32.xlu0 %v140
    %v142 = vpop.xlane.xlu0 %141
    %v143 = vsel %vm133, %v45, 0.0
    %144 = vadd.xlane.f32.xlu0 %v143
    %v145 = vpop.xlane.xlu0 %144
    %v146 = vsub.f32 %v142, %v136
    %v147 = vsub.f32 %v145, %v139
    %v148 = vmul.f32 %v146, %v147
    %v149 = vmin.f32 %v43, %v142
    %v150 = vmax.f32 %v39, %v136
    %v151 = vsub.f32 %v149, %v150
    %v152 = vmax.f32 %v151, 0.0
    %v153 = vmin.f32 %v45, %v145
    %v154 = vmax.f32 %v41, %v139
    %v155 = vsub.f32 %v153, %v154
    %v156 = vmax.f32 %v155, 0.0
    %v157 = vmul.f32 %v152, %v156
    %v158 = vadd.f32 %v48, %v148
    %v159 = vsub.f32 %v158, %v157
    %v160 = vmul.f32 %v159, 0.5
    %vm161 = vcmp.gt.f32.partialorder %v157, %v160
    %vm162 = vmor %vm161, %vm133
    %v163 = vsel %vm162, 2147483648, %v110
    %vm164 = vcmp.eq.s32.totalorder %v50, 1
    %v165 = vsel %vm130, 1, 0
    %vm166 = vcmp.eq.s32.totalorder %v165, 1
    %vm167 = vmand %vm164, %vm166
    %v168 = vsel %vm167, %v132, %v115
    %v169 = vadd.s32 %v112, %v165
    %v170 = vand.u32 %v163, 65535
    %v171 = vshra.s32 %v163, 16
    %v172 = vcvt.s32.f32 %v170
    %v173 = vcvt.s32.f32 %v171
    %174 = vmax.xlane.f32.xlu0 %v173
    %v175 = vpop.xlane.xlu0 %174
    %vm176 = vcmp.eq.f32.partialorder %v173, %v175
    %v177 = vsel %vm176, %v172, -inf
    %178 = vmax.xlane.f32.xlu0 %v177
    %v179 = vpop.xlane.xlu0 %178
    %v180 = vcvt.f32.s32 %v179
    %v181 = vcvt.f32.s32 %v175
    %v182 = vshll.u32 %v181, 16
    %v183 = vadd.s32 %v182, %v180
    %vm184 = vcmp.gt.s32.totalorder %v183, 2147483648
    %v185 = vand.u32 %v183, 127
    %v186 = vsub.s32 127, %v185
    %vm187 = vcmp.eq.s32.totalorder %v50, %v186
    %v188 = vsel %vm187, %v39, 0.0
    %189 = vadd.xlane.f32.xlu0 %v188
    %v190 = vpop.xlane.xlu0 %189
    %v191 = vsel %vm187, %v41, 0.0
    %192 = vadd.xlane.f32.xlu0 %v191
    %v193 = vpop.xlane.xlu0 %192
    %v194 = vsel %vm187, %v43, 0.0
    %195 = vadd.xlane.f32.xlu0 %v194
    %v196 = vpop.xlane.xlu0 %195
    %v197 = vsel %vm187, %v45, 0.0
    %198 = vadd.xlane.f32.xlu0 %v197
    %v199 = vpop.xlane.xlu0 %198
    %v200 = vsub.f32 %v196, %v190
    %v201 = vsub.f32 %v199, %v193
    %v202 = vmul.f32 %v200, %v201
    %v203 = vmin.f32 %v43, %v196
    %v204 = vmax.f32 %v39, %v190
    %v205 = vsub.f32 %v203, %v204
    %v206 = vmax.f32 %v205, 0.0
    %v207 = vmin.f32 %v45, %v199
    %v208 = vmax.f32 %v41, %v193
    %v209 = vsub.f32 %v207, %v208
    %v210 = vmax.f32 %v209, 0.0
    %v211 = vmul.f32 %v206, %v210
    %v212 = vadd.f32 %v48, %v202
    %v213 = vsub.f32 %v212, %v211
    %v214 = vmul.f32 %v213, 0.5
    %vm215 = vcmp.gt.f32.partialorder %v211, %v214
    %vm216 = vmor %vm215, %vm187
    %v217 = vsel %vm216, 2147483648, %v163
    %vm218 = vcmp.eq.s32.totalorder %v50, 2
    %v219 = vsel %vm184, 1, 0
    %vm220 = vcmp.eq.s32.totalorder %v219, 1
    %vm221 = vmand %vm218, %vm220
    %v222 = vsel %vm221, %v186, %v168
    %v223 = vadd.s32 %v169, %v219
    %v224 = vand.u32 %v217, 65535
    %v225 = vshra.s32 %v217, 16
    %v226 = vcvt.s32.f32 %v224
    %v227 = vcvt.s32.f32 %v225
    %228 = vmax.xlane.f32.xlu0 %v227
    %v229 = vpop.xlane.xlu0 %228
    %vm230 = vcmp.eq.f32.partialorder %v227, %v229
    %v231 = vsel %vm230, %v226, -inf
    %232 = vmax.xlane.f32.xlu0 %v231
    %v233 = vpop.xlane.xlu0 %232
    %v234 = vcvt.f32.s32 %v233
    %v235 = vcvt.f32.s32 %v229
    %v236 = vshll.u32 %v235, 16
    %v237 = vadd.s32 %v236, %v234
    %vm238 = vcmp.gt.s32.totalorder %v237, 2147483648
    %v239 = vand.u32 %v237, 127
    %v240 = vsub.s32 127, %v239
    %vm241 = vcmp.eq.s32.totalorder %v50, %v240
    %v242 = vsel %vm241, %v39, 0.0
    %243 = vadd.xlane.f32.xlu0 %v242
    %v244 = vpop.xlane.xlu0 %243
    %v245 = vsel %vm241, %v41, 0.0
    %246 = vadd.xlane.f32.xlu0 %v245
    %v247 = vpop.xlane.xlu0 %246
    %v248 = vsel %vm241, %v43, 0.0
    %249 = vadd.xlane.f32.xlu0 %v248
    %v250 = vpop.xlane.xlu0 %249
    %v251 = vsel %vm241, %v45, 0.0
    %252 = vadd.xlane.f32.xlu0 %v251
    %v253 = vpop.xlane.xlu0 %252
    %v254 = vsub.f32 %v250, %v244
    %v255 = vsub.f32 %v253, %v247
    %v256 = vmul.f32 %v254, %v255
    %v257 = vmin.f32 %v43, %v250
    %v258 = vmax.f32 %v39, %v244
    %v259 = vsub.f32 %v257, %v258
    %v260 = vmax.f32 %v259, 0.0
    %v261 = vmin.f32 %v45, %v253
    %v262 = vmax.f32 %v41, %v247
    %v263 = vsub.f32 %v261, %v262
    %v264 = vmax.f32 %v263, 0.0
    %v265 = vmul.f32 %v260, %v264
    %v266 = vadd.f32 %v48, %v256
    %v267 = vsub.f32 %v266, %v265
    %v268 = vmul.f32 %v267, 0.5
    %vm269 = vcmp.gt.f32.partialorder %v265, %v268
    %vm270 = vmor %vm269, %vm241
    %v271 = vsel %vm270, 2147483648, %v217
    %vm272 = vcmp.eq.s32.totalorder %v50, 3
    %v273 = vsel %vm238, 1, 0
    %vm274 = vcmp.eq.s32.totalorder %v273, 1
    %vm275 = vmand %vm272, %vm274
    %v276 = vsel %vm275, %v240, %v222
    %v277 = vadd.s32 %v223, %v273
    %v278 = vand.u32 %v271, 65535
    %v279 = vshra.s32 %v271, 16
    %v280 = vcvt.s32.f32 %v278
    %v281 = vcvt.s32.f32 %v279
    %282 = vmax.xlane.f32.xlu0 %v281
    %v283 = vpop.xlane.xlu0 %282
    %vm284 = vcmp.eq.f32.partialorder %v281, %v283
    %v285 = vsel %vm284, %v280, -inf
    %286 = vmax.xlane.f32.xlu0 %v285
    %v287 = vpop.xlane.xlu0 %286
    %v288 = vcvt.f32.s32 %v287
    %v289 = vcvt.f32.s32 %v283
    %v290 = vshll.u32 %v289, 16
    %v291 = vadd.s32 %v290, %v288
    %vm292 = vcmp.gt.s32.totalorder %v291, 2147483648
    %v293 = vand.u32 %v291, 127
    %v294 = vsub.s32 127, %v293
    %vm295 = vcmp.eq.s32.totalorder %v50, %v294
    %v296 = vsel %vm295, %v39, 0.0
    %297 = vadd.xlane.f32.xlu0 %v296
    %v298 = vpop.xlane.xlu0 %297
    %v299 = vsel %vm295, %v41, 0.0
    %300 = vadd.xlane.f32.xlu0 %v299
    %v301 = vpop.xlane.xlu0 %300
    %v302 = vsel %vm295, %v43, 0.0
    %303 = vadd.xlane.f32.xlu0 %v302
    %v304 = vpop.xlane.xlu0 %303
    %v305 = vsel %vm295, %v45, 0.0
    %306 = vadd.xlane.f32.xlu0 %v305
    %v307 = vpop.xlane.xlu0 %306
    %v308 = vsub.f32 %v304, %v298
    %v309 = vsub.f32 %v307, %v301
    %v310 = vmul.f32 %v308, %v309
    %v311 = vmin.f32 %v43, %v304
    %v312 = vmax.f32 %v39, %v298
    %v313 = vsub.f32 %v311, %v312
    %v314 = vmax.f32 %v313, 0.0
    %v315 = vmin.f32 %v45, %v307
    %v316 = vmax.f32 %v41, %v301
    %v317 = vsub.f32 %v315, %v316
    %v318 = vmax.f32 %v317, 0.0
    %v319 = vmul.f32 %v314, %v318
    %v320 = vadd.f32 %v48, %v310
    %v321 = vsub.f32 %v320, %v319
    %v322 = vmul.f32 %v321, 0.5
    %vm323 = vcmp.gt.f32.partialorder %v319, %v322
    %vm324 = vmor %vm323, %vm295
    %v325 = vsel %vm324, 2147483648, %v271
    %vm326 = vcmp.eq.s32.totalorder %v50, 4
    %v327 = vsel %vm292, 1, 0
    %vm328 = vcmp.eq.s32.totalorder %v327, 1
    %vm329 = vmand %vm326, %vm328
    %v330 = vsel %vm329, %v294, %v276
    %v331 = vadd.s32 %v277, %v327
    %v332 = vand.u32 %v325, 65535
    %v333 = vshra.s32 %v325, 16
    %v334 = vcvt.s32.f32 %v332
    %v335 = vcvt.s32.f32 %v333
    %336 = vmax.xlane.f32.xlu0 %v335
    %v337 = vpop.xlane.xlu0 %336
    %vm338 = vcmp.eq.f32.partialorder %v335, %v337
    %v339 = vsel %vm338, %v334, -inf
    %340 = vmax.xlane.f32.xlu0 %v339
    %v341 = vpop.xlane.xlu0 %340
    %v342 = vcvt.f32.s32 %v341
    %v343 = vcvt.f32.s32 %v337
    %v344 = vshll.u32 %v343, 16
    %v345 = vadd.s32 %v344, %v342
    %vm346 = vcmp.gt.s32.totalorder %v345, 2147483648
    %v347 = vand.u32 %v345, 127
    %v348 = vsub.s32 127, %v347
    %vm349 = vcmp.eq.s32.totalorder %v50, %v348
    %v350 = vsel %vm349, %v39, 0.0
    %351 = vadd.xlane.f32.xlu0 %v350
    %v352 = vpop.xlane.xlu0 %351
    %v353 = vsel %vm349, %v41, 0.0
    %354 = vadd.xlane.f32.xlu0 %v353
    %v355 = vpop.xlane.xlu0 %354
    %v356 = vsel %vm349, %v43, 0.0
    %357 = vadd.xlane.f32.xlu0 %v356
    %v358 = vpop.xlane.xlu0 %357
    %v359 = vsel %vm349, %v45, 0.0
    %360 = vadd.xlane.f32.xlu0 %v359
    %v361 = vpop.xlane.xlu0 %360
    %v362 = vsub.f32 %v358, %v352
    %v363 = vsub.f32 %v361, %v355
    %v364 = vmul.f32 %v362, %v363
    %v365 = vmin.f32 %v43, %v358
    %v366 = vmax.f32 %v39, %v352
    %v367 = vsub.f32 %v365, %v366
    %v368 = vmax.f32 %v367, 0.0
    %v369 = vmin.f32 %v45, %v361
    %v370 = vmax.f32 %v41, %v355
    %v371 = vsub.f32 %v369, %v370
    %v372 = vmax.f32 %v371, 0.0
    %v373 = vmul.f32 %v368, %v372
    %v374 = vadd.f32 %v48, %v364
    %v375 = vsub.f32 %v374, %v373
    %v376 = vmul.f32 %v375, 0.5
    %vm377 = vcmp.gt.f32.partialorder %v373, %v376
    %vm378 = vmor %vm377, %vm349
    %v379 = vsel %vm378, 2147483648, %v325
    %vm380 = vcmp.eq.s32.totalorder %v50, 5
    %v381 = vsel %vm346, 1, 0
    %vm382 = vcmp.eq.s32.totalorder %v381, 1
    %vm383 = vmand %vm380, %vm382
    %v384 = vsel %vm383, %v348, %v330
    %v385 = vadd.s32 %v331, %v381
    %v386 = vand.u32 %v379, 65535
    %v387 = vshra.s32 %v379, 16
    %v388 = vcvt.s32.f32 %v386
    %v389 = vcvt.s32.f32 %v387
    %390 = vmax.xlane.f32.xlu0 %v389
    %v391 = vpop.xlane.xlu0 %390
    %vm392 = vcmp.eq.f32.partialorder %v389, %v391
    %v393 = vsel %vm392, %v388, -inf
    %394 = vmax.xlane.f32.xlu0 %v393
    %v395 = vpop.xlane.xlu0 %394
    %v396 = vcvt.f32.s32 %v395
    %v397 = vcvt.f32.s32 %v391
    %v398 = vshll.u32 %v397, 16
    %v399 = vadd.s32 %v398, %v396
    %vm400 = vcmp.gt.s32.totalorder %v399, 2147483648
    %v401 = vand.u32 %v399, 127
    %v402 = vsub.s32 127, %v401
    %vm403 = vcmp.eq.s32.totalorder %v50, %v402
    %v404 = vsel %vm403, %v39, 0.0
    %405 = vadd.xlane.f32.xlu0 %v404
    %v406 = vpop.xlane.xlu0 %405
    %v407 = vsel %vm403, %v41, 0.0
    %408 = vadd.xlane.f32.xlu0 %v407
    %v409 = vpop.xlane.xlu0 %408
    %v410 = vsel %vm403, %v43, 0.0
    %411 = vadd.xlane.f32.xlu0 %v410
    %v412 = vpop.xlane.xlu0 %411
    %v413 = vsel %vm403, %v45, 0.0
    %414 = vadd.xlane.f32.xlu0 %v413
    %v415 = vpop.xlane.xlu0 %414
    %v416 = vsub.f32 %v412, %v406
    %v417 = vsub.f32 %v415, %v409
    %v418 = vmul.f32 %v416, %v417
    %v419 = vmin.f32 %v43, %v412
    %v420 = vmax.f32 %v39, %v406
    %v421 = vsub.f32 %v419, %v420
    %v422 = vmax.f32 %v421, 0.0
    %v423 = vmin.f32 %v45, %v415
    %v424 = vmax.f32 %v41, %v409
    %v425 = vsub.f32 %v423, %v424
    %v426 = vmax.f32 %v425, 0.0
    %v427 = vmul.f32 %v422, %v426
    %v428 = vadd.f32 %v48, %v418
    %v429 = vsub.f32 %v428, %v427
    %v430 = vmul.f32 %v429, 0.5
    %vm431 = vcmp.gt.f32.partialorder %v427, %v430
    %vm432 = vmor %vm431, %vm403
    %v433 = vsel %vm432, 2147483648, %v379
    %vm434 = vcmp.eq.s32.totalorder %v50, 6
    %v435 = vsel %vm400, 1, 0
    %vm436 = vcmp.eq.s32.totalorder %v435, 1
    %vm437 = vmand %vm434, %vm436
    %v438 = vsel %vm437, %v402, %v384
    %v439 = vadd.s32 %v385, %v435
    %v440 = vand.u32 %v433, 65535
    %v441 = vshra.s32 %v433, 16
    %v442 = vcvt.s32.f32 %v440
    %v443 = vcvt.s32.f32 %v441
    %444 = vmax.xlane.f32.xlu0 %v443
    %v445 = vpop.xlane.xlu0 %444
    %vm446 = vcmp.eq.f32.partialorder %v443, %v445
    %v447 = vsel %vm446, %v442, -inf
    %448 = vmax.xlane.f32.xlu0 %v447
    %v449 = vpop.xlane.xlu0 %448
    %v450 = vcvt.f32.s32 %v449
    %v451 = vcvt.f32.s32 %v445
    %v452 = vshll.u32 %v451, 16
    %v453 = vadd.s32 %v452, %v450
    %vm454 = vcmp.gt.s32.totalorder %v453, 2147483648
    %v455 = vand.u32 %v453, 127
    %v456 = vsub.s32 127, %v455
    %vm457 = vcmp.eq.s32.totalorder %v50, %v456
    %v458 = vsel %vm457, %v39, 0.0
    %459 = vadd.xlane.f32.xlu0 %v458
    %v460 = vpop.xlane.xlu0 %459
    %v461 = vsel %vm457, %v41, 0.0
    %462 = vadd.xlane.f32.xlu0 %v461
    %v463 = vpop.xlane.xlu0 %462
    %v464 = vsel %vm457, %v43, 0.0
    %465 = vadd.xlane.f32.xlu0 %v464
    %v466 = vpop.xlane.xlu0 %465
    %v467 = vsel %vm457, %v45, 0.0
    %468 = vadd.xlane.f32.xlu0 %v467
    %v469 = vpop.xlane.xlu0 %468
    %v470 = vsub.f32 %v466, %v460
    %v471 = vsub.f32 %v469, %v463
    %v472 = vmul.f32 %v470, %v471
    %v473 = vmin.f32 %v43, %v466
    %v474 = vmax.f32 %v39, %v460
    %v475 = vsub.f32 %v473, %v474
    %v476 = vmax.f32 %v475, 0.0
    %v477 = vmin.f32 %v45, %v469
    %v478 = vmax.f32 %v41, %v463
    %v479 = vsub.f32 %v477, %v478
    %v480 = vmax.f32 %v479, 0.0
    %v481 = vmul.f32 %v476, %v480
    %v482 = vadd.f32 %v48, %v472
    %v483 = vsub.f32 %v482, %v481
    %v484 = vmul.f32 %v483, 0.5
    %vm485 = vcmp.gt.f32.partialorder %v481, %v484
    %vm486 = vmor %vm485, %vm457
    %v487 = vsel %vm486, 2147483648, %v433
    %vm488 = vcmp.eq.s32.totalorder %v50, 7
    %v489 = vsel %vm454, 1, 0
    %vm490 = vcmp.eq.s32.totalorder %v489, 1
    %vm491 = vmand %vm488, %vm490
    %v492 = vsel %vm491, %v456, %v438
    %v493 = vadd.s32 %v439, %v489
    %v494 = vand.u32 %v487, 65535
    %v495 = vshra.s32 %v487, 16
    %v496 = vcvt.s32.f32 %v494
    %v497 = vcvt.s32.f32 %v495
    %498 = vmax.xlane.f32.xlu0 %v497
    %v499 = vpop.xlane.xlu0 %498
    %vm500 = vcmp.eq.f32.partialorder %v497, %v499
    %v501 = vsel %vm500, %v496, -inf
    %502 = vmax.xlane.f32.xlu0 %v501
    %v503 = vpop.xlane.xlu0 %502
    %v504 = vcvt.f32.s32 %v503
    %v505 = vcvt.f32.s32 %v499
    %v506 = vshll.u32 %v505, 16
    %v507 = vadd.s32 %v506, %v504
    %vm508 = vcmp.gt.s32.totalorder %v507, 2147483648
    %v509 = vand.u32 %v507, 127
    %v510 = vsub.s32 127, %v509
    %vm511 = vcmp.eq.s32.totalorder %v50, %v510
    %v512 = vsel %vm511, %v39, 0.0
    %513 = vadd.xlane.f32.xlu0 %v512
    %v514 = vpop.xlane.xlu0 %513
    %v515 = vsel %vm511, %v41, 0.0
    %516 = vadd.xlane.f32.xlu0 %v515
    %v517 = vpop.xlane.xlu0 %516
    %v518 = vsel %vm511, %v43, 0.0
    %519 = vadd.xlane.f32.xlu0 %v518
    %v520 = vpop.xlane.xlu0 %519
    %v521 = vsel %vm511, %v45, 0.0
    %522 = vadd.xlane.f32.xlu0 %v521
    %v523 = vpop.xlane.xlu0 %522
    %v524 = vsub.f32 %v520, %v514
    %v525 = vsub.f32 %v523, %v517
    %v526 = vmul.f32 %v524, %v525
    %v527 = vmin.f32 %v43, %v520
    %v528 = vmax.f32 %v39, %v514
    %v529 = vsub.f32 %v527, %v528
    %v530 = vmax.f32 %v529, 0.0
    %v531 = vmin.f32 %v45, %v523
    %v532 = vmax.f32 %v41, %v517
    %v533 = vsub.f32 %v531, %v532
    %v534 = vmax.f32 %v533, 0.0
    %v535 = vmul.f32 %v530, %v534
    %v536 = vadd.f32 %v48, %v526
    %v537 = vsub.f32 %v536, %v535
    %v538 = vmul.f32 %v537, 0.5
    %vm539 = vcmp.gt.f32.partialorder %v535, %v538
    %vm540 = vmor %vm539, %vm511
    %v541 = vsel %vm540, 2147483648, %v487
    %vm542 = vcmp.eq.s32.totalorder %v50, 8
    %v543 = vsel %vm508, 1, 0
    %vm544 = vcmp.eq.s32.totalorder %v543, 1
    %vm545 = vmand %vm542, %vm544
    %v546 = vsel %vm545, %v510, %v492
    %v547 = vadd.s32 %v493, %v543
    %v548 = vand.u32 %v541, 65535
    %v549 = vshra.s32 %v541, 16
    %v550 = vcvt.s32.f32 %v548
    %v551 = vcvt.s32.f32 %v549
    %552 = vmax.xlane.f32.xlu0 %v551
    %v553 = vpop.xlane.xlu0 %552
    %vm554 = vcmp.eq.f32.partialorder %v551, %v553
    %v555 = vsel %vm554, %v550, -inf
    %556 = vmax.xlane.f32.xlu0 %v555
    %v557 = vpop.xlane.xlu0 %556
    %v558 = vcvt.f32.s32 %v557
    %v559 = vcvt.f32.s32 %v553
    %v560 = vshll.u32 %v559, 16
    %v561 = vadd.s32 %v560, %v558
    %vm562 = vcmp.gt.s32.totalorder %v561, 2147483648
    %v563 = vand.u32 %v561, 127
    %v564 = vsub.s32 127, %v563
    %vm565 = vcmp.eq.s32.totalorder %v50, %v564
    %v566 = vsel %vm565, %v39, 0.0
    %567 = vadd.xlane.f32.xlu0 %v566
    %v568 = vpop.xlane.xlu0 %567
    %v569 = vsel %vm565, %v41, 0.0
    %570 = vadd.xlane.f32.xlu0 %v569
    %v571 = vpop.xlane.xlu0 %570
    %v572 = vsel %vm565, %v43, 0.0
    %573 = vadd.xlane.f32.xlu0 %v572
    %v574 = vpop.xlane.xlu0 %573
    %v575 = vsel %vm565, %v45, 0.0
    %576 = vadd.xlane.f32.xlu0 %v575
    %v577 = vpop.xlane.xlu0 %576
    %v578 = vsub.f32 %v574, %v568
    %v579 = vsub.f32 %v577, %v571
    %v580 = vmul.f32 %v578, %v579
    %v581 = vmin.f32 %v43, %v574
    %v582 = vmax.f32 %v39, %v568
    %v583 = vsub.f32 %v581, %v582
    %v584 = vmax.f32 %v583, 0.0
    %v585 = vmin.f32 %v45, %v577
    %v586 = vmax.f32 %v41, %v571
    %v587 = vsub.f32 %v585, %v586
    %v588 = vmax.f32 %v587, 0.0
    %v589 = vmul.f32 %v584, %v588
    %v590 = vadd.f32 %v48, %v580
    %v591 = vsub.f32 %v590, %v589
    %v592 = vmul.f32 %v591, 0.5
    %vm593 = vcmp.gt.f32.partialorder %v589, %v592
    %vm594 = vmor %vm593, %vm565
    %v595 = vsel %vm594, 2147483648, %v541
    %vm596 = vcmp.eq.s32.totalorder %v50, 9
    %v597 = vsel %vm562, 1, 0
    %vm598 = vcmp.eq.s32.totalorder %v597, 1
    %vm599 = vmand %vm596, %vm598
    %v600 = vsel %vm599, %v564, %v546
    %v601 = vadd.s32 %v547, %v597
    %v602 = vand.u32 %v595, 65535
    %v603 = vshra.s32 %v595, 16
    %v604 = vcvt.s32.f32 %v602
    %v605 = vcvt.s32.f32 %v603
    %606 = vmax.xlane.f32.xlu0 %v605
    %v607 = vpop.xlane.xlu0 %606
    %vm608 = vcmp.eq.f32.partialorder %v605, %v607
    %v609 = vsel %vm608, %v604, -inf
    %610 = vmax.xlane.f32.xlu0 %v609
    %v611 = vpop.xlane.xlu0 %610
    %v612 = vcvt.f32.s32 %v611
    %v613 = vcvt.f32.s32 %v607
    %v614 = vshll.u32 %v613, 16
    %v615 = vadd.s32 %v614, %v612
    %vm616 = vcmp.gt.s32.totalorder %v615, 2147483648
    %v617 = vand.u32 %v615, 127
    %v618 = vsub.s32 127, %v617
    %vm619 = vcmp.eq.s32.totalorder %v50, %v618
    %v620 = vsel %vm619, %v39, 0.0
    %621 = vadd.xlane.f32.xlu0 %v620
    %v622 = vpop.xlane.xlu0 %621
    %v623 = vsel %vm619, %v41, 0.0
    %624 = vadd.xlane.f32.xlu0 %v623
    %v625 = vpop.xlane.xlu0 %624
    %v626 = vsel %vm619, %v43, 0.0
    %627 = vadd.xlane.f32.xlu0 %v626
    %v628 = vpop.xlane.xlu0 %627
    %v629 = vsel %vm619, %v45, 0.0
    %630 = vadd.xlane.f32.xlu0 %v629
    %v631 = vpop.xlane.xlu0 %630
    %v632 = vsub.f32 %v628, %v622
    %v633 = vsub.f32 %v631, %v625
    %v634 = vmul.f32 %v632, %v633
    %v635 = vmin.f32 %v43, %v628
    %v636 = vmax.f32 %v39, %v622
    %v637 = vsub.f32 %v635, %v636
    %v638 = vmax.f32 %v637, 0.0
    %v639 = vmin.f32 %v45, %v631
    %v640 = vmax.f32 %v41, %v625
    %v641 = vsub.f32 %v639, %v640
    %v642 = vmax.f32 %v641, 0.0
    %v643 = vmul.f32 %v638, %v642
    %v644 = vadd.f32 %v48, %v634
    %v645 = vsub.f32 %v644, %v643
    %v646 = vmul.f32 %v645, 0.5
    %vm647 = vcmp.gt.f32.partialorder %v643, %v646
    %vm648 = vmor %vm647, %vm619
    %v649 = vsel %vm648, 2147483648, %v595
    %vm650 = vcmp.eq.s32.totalorder %v50, 10
    %v651 = vsel %vm616, 1, 0
    %vm652 = vcmp.eq.s32.totalorder %v651, 1
    %vm653 = vmand %vm650, %vm652
    %v654 = vsel %vm653, %v618, %v600
    %v655 = vadd.s32 %v601, %v651
    %v656 = vand.u32 %v649, 65535
    %v657 = vshra.s32 %v649, 16
    %v658 = vcvt.s32.f32 %v656
    %v659 = vcvt.s32.f32 %v657
    %660 = vmax.xlane.f32.xlu0 %v659
    %v661 = vpop.xlane.xlu0 %660
    %vm662 = vcmp.eq.f32.partialorder %v659, %v661
    %v663 = vsel %vm662, %v658, -inf
    %664 = vmax.xlane.f32.xlu0 %v663
    %v665 = vpop.xlane.xlu0 %664
    %v666 = vcvt.f32.s32 %v665
    %v667 = vcvt.f32.s32 %v661
    %v668 = vshll.u32 %v667, 16
    %v669 = vadd.s32 %v668, %v666
    %vm670 = vcmp.gt.s32.totalorder %v669, 2147483648
    %v671 = vand.u32 %v669, 127
    %v672 = vsub.s32 127, %v671
    %vm673 = vcmp.eq.s32.totalorder %v50, %v672
    %v674 = vsel %vm673, %v39, 0.0
    %675 = vadd.xlane.f32.xlu0 %v674
    %v676 = vpop.xlane.xlu0 %675
    %v677 = vsel %vm673, %v41, 0.0
    %678 = vadd.xlane.f32.xlu0 %v677
    %v679 = vpop.xlane.xlu0 %678
    %v680 = vsel %vm673, %v43, 0.0
    %681 = vadd.xlane.f32.xlu0 %v680
    %v682 = vpop.xlane.xlu0 %681
    %v683 = vsel %vm673, %v45, 0.0
    %684 = vadd.xlane.f32.xlu0 %v683
    %v685 = vpop.xlane.xlu0 %684
    %v686 = vsub.f32 %v682, %v676
    %v687 = vsub.f32 %v685, %v679
    %v688 = vmul.f32 %v686, %v687
    %v689 = vmin.f32 %v43, %v682
    %v690 = vmax.f32 %v39, %v676
    %v691 = vsub.f32 %v689, %v690
    %v692 = vmax.f32 %v691, 0.0
    %v693 = vmin.f32 %v45, %v685
    %v694 = vmax.f32 %v41, %v679
    %v695 = vsub.f32 %v693, %v694
    %v696 = vmax.f32 %v695, 0.0
    %v697 = vmul.f32 %v692, %v696
    %v698 = vadd.f32 %v48, %v688
    %v699 = vsub.f32 %v698, %v697
    %v700 = vmul.f32 %v699, 0.5
    %vm701 = vcmp.gt.f32.partialorder %v697, %v700
    %vm702 = vmor %vm701, %vm673
    %v703 = vsel %vm702, 2147483648, %v649
    %vm704 = vcmp.eq.s32.totalorder %v50, 11
    %v705 = vsel %vm670, 1, 0
    %vm706 = vcmp.eq.s32.totalorder %v705, 1
    %vm707 = vmand %vm704, %vm706
    %v708 = vsel %vm707, %v672, %v654
    %v709 = vadd.s32 %v655, %v705
    %v710 = vand.u32 %v703, 65535
    %v711 = vshra.s32 %v703, 16
    %v712 = vcvt.s32.f32 %v710
    %v713 = vcvt.s32.f32 %v711
    %714 = vmax.xlane.f32.xlu0 %v713
    %v715 = vpop.xlane.xlu0 %714
    %vm716 = vcmp.eq.f32.partialorder %v713, %v715
    %v717 = vsel %vm716, %v712, -inf
    %718 = vmax.xlane.f32.xlu0 %v717
    %v719 = vpop.xlane.xlu0 %718
    %v720 = vcvt.f32.s32 %v719
    %v721 = vcvt.f32.s32 %v715
    %v722 = vshll.u32 %v721, 16
    %v723 = vadd.s32 %v722, %v720
    %vm724 = vcmp.gt.s32.totalorder %v723, 2147483648
    %v725 = vand.u32 %v723, 127
    %v726 = vsub.s32 127, %v725
    %vm727 = vcmp.eq.s32.totalorder %v50, %v726
    %v728 = vsel %vm727, %v39, 0.0
    %729 = vadd.xlane.f32.xlu0 %v728
    %v730 = vpop.xlane.xlu0 %729
    %v731 = vsel %vm727, %v41, 0.0
    %732 = vadd.xlane.f32.xlu0 %v731
    %v733 = vpop.xlane.xlu0 %732
    %v734 = vsel %vm727, %v43, 0.0
    %735 = vadd.xlane.f32.xlu0 %v734
    %v736 = vpop.xlane.xlu0 %735
    %v737 = vsel %vm727, %v45, 0.0
    %738 = vadd.xlane.f32.xlu0 %v737
    %v739 = vpop.xlane.xlu0 %738
    %v740 = vsub.f32 %v736, %v730
    %v741 = vsub.f32 %v739, %v733
    %v742 = vmul.f32 %v740, %v741
    %v743 = vmin.f32 %v43, %v736
    %v744 = vmax.f32 %v39, %v730
    %v745 = vsub.f32 %v743, %v744
    %v746 = vmax.f32 %v745, 0.0
    %v747 = vmin.f32 %v45, %v739
    %v748 = vmax.f32 %v41, %v733
    %v749 = vsub.f32 %v747, %v748
    %v750 = vmax.f32 %v749, 0.0
    %v751 = vmul.f32 %v746, %v750
    %v752 = vadd.f32 %v48, %v742
    %v753 = vsub.f32 %v752, %v751
    %v754 = vmul.f32 %v753, 0.5
    %vm755 = vcmp.gt.f32.partialorder %v751, %v754
    %vm756 = vmor %vm755, %vm727
    %v757 = vsel %vm756, 2147483648, %v703
    %vm758 = vcmp.eq.s32.totalorder %v50, 12
    %v759 = vsel %vm724, 1, 0
    %vm760 = vcmp.eq.s32.totalorder %v759, 1
    %vm761 = vmand %vm758, %vm760
    %v762 = vsel %vm761, %v726, %v708
    %v763 = vadd.s32 %v709, %v759
    %v764 = vand.u32 %v757, 65535
    %v765 = vshra.s32 %v757, 16
    %v766 = vcvt.s32.f32 %v764
    %v767 = vcvt.s32.f32 %v765
    %768 = vmax.xlane.f32.xlu0 %v767
    %v769 = vpop.xlane.xlu0 %768
    %vm770 = vcmp.eq.f32.partialorder %v767, %v769
    %v771 = vsel %vm770, %v766, -inf
    %772 = vmax.xlane.f32.xlu0 %v771
    %v773 = vpop.xlane.xlu0 %772
    %v774 = vcvt.f32.s32 %v773
    %v775 = vcvt.f32.s32 %v769
    %v776 = vshll.u32 %v775, 16
    %v777 = vadd.s32 %v776, %v774
    %vm778 = vcmp.gt.s32.totalorder %v777, 2147483648
    %v779 = vand.u32 %v777, 127
    %v780 = vsub.s32 127, %v779
    %vm781 = vcmp.eq.s32.totalorder %v50, %v780
    %v782 = vsel %vm781, %v39, 0.0
    %783 = vadd.xlane.f32.xlu0 %v782
    %v784 = vpop.xlane.xlu0 %783
    %v785 = vsel %vm781, %v41, 0.0
    %786 = vadd.xlane.f32.xlu0 %v785
    %v787 = vpop.xlane.xlu0 %786
    %v788 = vsel %vm781, %v43, 0.0
    %789 = vadd.xlane.f32.xlu0 %v788
    %v790 = vpop.xlane.xlu0 %789
    %v791 = vsel %vm781, %v45, 0.0
    %792 = vadd.xlane.f32.xlu0 %v791
    %v793 = vpop.xlane.xlu0 %792
    %v794 = vsub.f32 %v790, %v784
    %v795 = vsub.f32 %v793, %v787
    %v796 = vmul.f32 %v794, %v795
    %v797 = vmin.f32 %v43, %v790
    %v798 = vmax.f32 %v39, %v784
    %v799 = vsub.f32 %v797, %v798
    %v800 = vmax.f32 %v799, 0.0
    %v801 = vmin.f32 %v45, %v793
    %v802 = vmax.f32 %v41, %v787
    %v803 = vsub.f32 %v801, %v802
    %v804 = vmax.f32 %v803, 0.0
    %v805 = vmul.f32 %v800, %v804
    %v806 = vadd.f32 %v48, %v796
    %v807 = vsub.f32 %v806, %v805
    %v808 = vmul.f32 %v807, 0.5
    %vm809 = vcmp.gt.f32.partialorder %v805, %v808
    %vm810 = vmor %vm809, %vm781
    %v811 = vsel %vm810, 2147483648, %v757
    %vm812 = vcmp.eq.s32.totalorder %v50, 13
    %v813 = vsel %vm778, 1, 0
    %vm814 = vcmp.eq.s32.totalorder %v813, 1
    %vm815 = vmand %vm812, %vm814
    %v816 = vsel %vm815, %v780, %v762
    %v817 = vadd.s32 %v763, %v813
    %v818 = vand.u32 %v811, 65535
    %v819 = vshra.s32 %v811, 16
    %v820 = vcvt.s32.f32 %v818
    %v821 = vcvt.s32.f32 %v819
    %822 = vmax.xlane.f32.xlu0 %v821
    %v823 = vpop.xlane.xlu0 %822
    %vm824 = vcmp.eq.f32.partialorder %v821, %v823
    %v825 = vsel %vm824, %v820, -inf
    %826 = vmax.xlane.f32.xlu0 %v825
    %v827 = vpop.xlane.xlu0 %826
    %v828 = vcvt.f32.s32 %v827
    %v829 = vcvt.f32.s32 %v823
    %v830 = vshll.u32 %v829, 16
    %v831 = vadd.s32 %v830, %v828
    %vm832 = vcmp.gt.s32.totalorder %v831, 2147483648
    %v833 = vand.u32 %v831, 127
    %v834 = vsub.s32 127, %v833
    %vm835 = vcmp.eq.s32.totalorder %v50, %v834
    %v836 = vsel %vm835, %v39, 0.0
    %837 = vadd.xlane.f32.xlu0 %v836
    %v838 = vpop.xlane.xlu0 %837
    %v839 = vsel %vm835, %v41, 0.0
    %840 = vadd.xlane.f32.xlu0 %v839
    %v841 = vpop.xlane.xlu0 %840
    %v842 = vsel %vm835, %v43, 0.0
    %843 = vadd.xlane.f32.xlu0 %v842
    %v844 = vpop.xlane.xlu0 %843
    %v845 = vsel %vm835, %v45, 0.0
    %846 = vadd.xlane.f32.xlu0 %v845
    %v847 = vpop.xlane.xlu0 %846
    %v848 = vsub.f32 %v844, %v838
    %v849 = vsub.f32 %v847, %v841
    %v850 = vmul.f32 %v848, %v849
    %v851 = vmin.f32 %v43, %v844
    %v852 = vmax.f32 %v39, %v838
    %v853 = vsub.f32 %v851, %v852
    %v854 = vmax.f32 %v853, 0.0
    %v855 = vmin.f32 %v45, %v847
    %v856 = vmax.f32 %v41, %v841
    %v857 = vsub.f32 %v855, %v856
    %v858 = vmax.f32 %v857, 0.0
    %v859 = vmul.f32 %v854, %v858
    %v860 = vadd.f32 %v48, %v850
    %v861 = vsub.f32 %v860, %v859
    %v862 = vmul.f32 %v861, 0.5
    %vm863 = vcmp.gt.f32.partialorder %v859, %v862
    %vm864 = vmor %vm863, %vm835
    %v865 = vsel %vm864, 2147483648, %v811
    %vm866 = vcmp.eq.s32.totalorder %v50, 14
    %v867 = vsel %vm832, 1, 0
    %vm868 = vcmp.eq.s32.totalorder %v867, 1
    %vm869 = vmand %vm866, %vm868
    %v870 = vsel %vm869, %v834, %v816
    %v871 = vadd.s32 %v817, %v867
    %v872 = vand.u32 %v865, 65535
    %v873 = vshra.s32 %v865, 16
    %v874 = vcvt.s32.f32 %v872
    %v875 = vcvt.s32.f32 %v873
    %876 = vmax.xlane.f32.xlu0 %v875
    %v877 = vpop.xlane.xlu0 %876
    %vm878 = vcmp.eq.f32.partialorder %v875, %v877
    %v879 = vsel %vm878, %v874, -inf
    %880 = vmax.xlane.f32.xlu0 %v879
    %v881 = vpop.xlane.xlu0 %880
    %v882 = vcvt.f32.s32 %v881
    %v883 = vcvt.f32.s32 %v877
    %v884 = vshll.u32 %v883, 16
    %v885 = vadd.s32 %v884, %v882
    %vm886 = vcmp.gt.s32.totalorder %v885, 2147483648
    %v887 = vand.u32 %v885, 127
    %v888 = vsub.s32 127, %v887
    %vm889 = vcmp.eq.s32.totalorder %v50, 15
    %v890 = vsel %vm886, 1, 0
    %vm891 = vcmp.eq.s32.totalorder %v890, 1
    %vm892 = vmand %vm889, %vm891
    %v893 = vsel %vm892, %v888, %v870
    %v894 = vadd.s32 %v871, %v890
    %vm895 = vcmp.eq.s32.totalorder %v50, 16
    %v896 = vsel %vm895, %v894, %v893
    %897 = vst [vmem:[#allocation7] sm:$0xff] %v896
    // Predicated region
    $region18: #{tpu_custom_call.1} parent=1 // pred_check
      _
    $region19: #{tpu_custom_call.1} parent=1 // pred_check_branch
      %899 = sbr.rel (0) target = $region21
    $region20: #{tpu_custom_call.1} parent=1 // pred_region
      %s901 = ssub.s32 128, 128
      %902 = vsyncadd [#allocation4], %s901
      %s904 = sshll.u32 [#allocation7], 4
      %s905 = int_to_ptr.vmem [resolvable:$true] %s904
      %907 = dma.vmem_to_hbm [thread:$0]  %s905, 128, %s2, [#allocation4]
    $region21: #{tpu_custom_call.1} parent=1 // pred_fallthru
      _
    // Predicated region
    $region22: #{tpu_custom_call.1} parent=1 // pred_check
      _
    $region23: #{tpu_custom_call.1} parent=1 // pred_check_branch
      %909 = sbr.rel (0) target = $region25
    $region24: #{tpu_custom_call.1} parent=1 // pred_region
      %910 = dma.done [#allocation4], 128
    $region25: #{tpu_custom_call.1} parent=1 // pred_fallthru
      _
    %911 = vsyncpa [#allocation3], 1
    %912 = vsyncpa [#allocation6], 1
    %913 = vsyncpa [#allocation4], 1

</llo_original>
